<compile_context>
chip_gen: v7x
topology: tpu7x:2x2x1
jax: 0.10.0
libtpu: 0.0.40
codegen_flags: <defaults>
</compile_context>

<pallas_src>
import math

import jax
import jax.numpy as jnp
from jax import lax
from jax.experimental import pallas as pl
from jax.experimental.pallas import tpu as pltpu

KH = KW = 3
PAD = 1
BN_EPS = 1e-5
LANE = 128          # lane-dense channel padding target
_INV_SQRT2 = 0.7071067811865476


def _round_up(x, m):
    return (x + m - 1) // m * m


def _gelu_exact(x):
    # PyTorch nn.GELU() default == exact erf formulation (kept in f32; v5e
    # has no bf16 VPU/EUP and f32 keeps numerics closest to the reference).
    return 0.5 * x * (1.0 + lax.erf(x * _INV_SQRT2))


# --------------------------------------------------------------------------
# Kernel 1: conv1 (single fused K = 9*Cin matmul via im2col) + per-tile BN
#           statistics.  Writes the conv1 output directly into the interior
#           of a pre-padded (H+2, W+2) bf16 buffer (no zero-fill; kernel 2's
#           interior mask makes the halo contribution zero).
# --------------------------------------------------------------------------
def conv1_stats_kernel(xp_ref, w1_ref, b1_ref, hpad_ref, stats_ref):
    # xp_ref:    (1, H+2, W+2, Cin)   bf16  spatially pre-padded input tile
    # w1_ref:    (9*Cin, Cp)          bf16  fused im2col weights
    # b1_ref:    (1, Cp)              f32
    # hpad_ref:  (1, H+2, W+2, Cp)    bf16  pre-BN conv1 out (interior only)
    # stats_ref: (1, 2, Cp)           f32   row0 = tile mean, row1 = tile M2
    _, Hp, Wp, Cin = xp_ref.shape
    H, W = Hp - 2 * PAD, Wp - 2 * PAD
    Cp = hpad_ref.shape[-1]

    xt = xp_ref[0]                                       # (H+2, W+2, Cin) bf16

    # im2col: the 9 shifted views concatenated along channels -> one MXU
    # matmul with contracting dim 9*Cin.  Slices/concat stay in bf16 so the
    # relayout copies move half the bytes (conv1 is relayout-bound, K=9*Cin
    # underfills the MXU anyway).
    cols = []
    for dy in range(KH):
        for dx in range(KW):
            cols.append(xt[dy:dy + H, dx:dx + W, :].reshape(H * W, Cin))
    patch = jnp.concatenate(cols, axis=-1)               # (H*W, 9*Cin) bf16

    y = jnp.dot(patch, w1_ref[...],
                preferred_element_type=jnp.float32) + b1_ref[...]  # (H*W, Cp) f32

    # Per-tile BN statistics from the f32 accumulator (two-pass: mean, then
    # centered sum of squares, avoiding E[x^2] - E[x]^2 cancellation).
    mean_t = jnp.mean(y, axis=0, keepdims=True)                    # (1, Cp)
    m2_t = jnp.sum(jnp.square(y - mean_t), axis=0, keepdims=True)  # (1, Cp)
    stats_ref[0, 0:1, :] = mean_t
    stats_ref[0, 1:2, :] = m2_t

    # Single bf16 interior store; the halo is deliberately left unwritten
    # (its value never reaches the result because kernel 2 masks it).
    hpad_ref[0, PAD:PAD + H, PAD:PAD + W, :] = (
        y.astype(jnp.bfloat16).reshape(H, W, Cp))


# --------------------------------------------------------------------------
# Kernel 2: fused BatchNorm-apply + GELU + conv2 as a single deep-K im2col
#           matmul (K = 9*Cp = 1152: fills the 256-deep MXU contracting dim
#           on v6e/v7x and keeps the accumulation inside the MXU / MRB —
#           no chained per-tap f32 VALU adds).
# --------------------------------------------------------------------------
def bn_gelu_conv2_kernel(hpad_ref, scale_ref, shift_ref, w2_ref, b2_ref, out_ref):
    # hpad_ref:  (1, H+2, W+2, Cp)  bf16
    # scale_ref: (1, Cp) f32   gamma / sqrt(var + eps)
    # shift_ref: (1, Cp) f32   beta - mean * scale
    # w2_ref:    (9*Cp, Cp)    bf16  fused im2col weights
    # b2_ref:    (1, Cp)       f32
    # out_ref:   (1, H, W, Cp) f32
    _, Hp, Wp, Cp = hpad_ref.shape
    H, W = Hp - 2 * PAD, Wp - 2 * PAD

    # Upcast to f32 only for the BN affine + exact GELU.
    h = hpad_ref[0].astype(jnp.float32)                  # (H+2, W+2, Cp)
    a = _gelu_exact(h * scale_ref[0] + shift_ref[0])

    # The reference module zero-pads *after* BN+GELU; zero the 1-pixel halo.
    # Mask is built at (Hp, Wp, 1) and lane-broadcast inside the select
    # (128x less integer VALU work / vreg footprint than a full-width mask).
    row = lax.broadcasted_iota(jnp.int32, (Hp, Wp, 1), 0)
    col = lax.broadcasted_iota(jnp.int32, (Hp, Wp, 1), 1)
    interior = (row >= PAD) & (row < PAD + H) & (col >= PAD) & (col < PAD + W)
    a = jnp.where(interior, a, 0.0).astype(jnp.bfloat16)

    # im2col for conv2: 9 shifted views concatenated along channels -> one
    # (H*W, 9*Cp) x (9*Cp, Cp) MXU matmul, bias added once at the end.
    cols = []
    for dy in range(KH):
        for dx in range(KW):
            cols.append(a[dy:dy + H, dx:dx + W, :].reshape(H * W, Cp))
    patch = jnp.concatenate(cols, axis=-1)               # (H*W, 9*Cp) bf16

    acc = jnp.dot(patch, w2_ref[...],
                  preferred_element_type=jnp.float32) + b2_ref[...]

    out_ref[...] = acc.reshape(1, H, W, Cp).astype(out_ref.dtype)


# --------------------------------------------------------------------------
# Wrapper
# --------------------------------------------------------------------------
def basic_conv_block(x_nchw, params):
    """Forward pass of BasicConvBlock. Input/output are NCHW float32."""
    w1, b1, gamma, beta, w2, b2 = params
    N, Cin, H, W = x_nchw.shape
    Cout = w1.shape[-1]
    Cp = _round_up(Cout, LANE)       # lane-dense channel dim (mult. of 128)
    Hp, Wp = H + 2 * PAD, W + 2 * PAD

    # NHWC + spatial 'same' pad for conv1, cast to bf16 in the wrapper so the
    # kernel-1 input DMA and im2col relayouts move half the bytes (matmul
    # operands were bf16 already, so numerics are unchanged).
    x = jnp.transpose(x_nchw, (0, 2, 3, 1)).astype(jnp.bfloat16)
    xp = jnp.pad(x, ((0, 0), (PAD, PAD), (PAD, PAD), (0, 0)))

    # Pad channels to Cp with zeros; matmul operands in bf16 (f32 accumulate).
    w1p = jnp.pad(w1, ((0, 0), (0, 0), (0, Cp - Cout))) \
             .reshape(KH * KW * Cin, Cp).astype(jnp.bfloat16)
    b1p = jnp.pad(b1, (0, Cp - Cout)).reshape(1, Cp).astype(jnp.float32)
    # conv2 weights pre-reshaped for the single deep-K (9*Cp) im2col matmul;
    # row order matches the tap-major concat in the kernel.
    w2p = jnp.pad(w2, ((0, 0), (0, Cp - Cout), (0, Cp - Cout))) \
             .reshape(KH * KW * Cp, Cp).astype(jnp.bfloat16)
    b2p = jnp.pad(b2, (0, Cp - Cout)).reshape(1, Cp).astype(jnp.float32)
    gammap = jnp.pad(gamma, (0, Cp - Cout)).astype(jnp.float32)
    betap = jnp.pad(beta, (0, Cp - Cout)).astype(jnp.float32)

    # Real grid over the batch: DMA/compute pipelining + megacore sharding.
    # Per-block VMEM here is ~1-2 MiB, far below the limit on every gen
    # (v5e/v6e: 128 MiB physical, v7x: 64 MiB).
    # TODO(synk): for large H*W (or small N on v7x), add a second "parallel"
    # row-block grid axis with a manual halo DMA (memory_space=pl.ANY +
    # make_async_copy) so each TensorCore sees >=4-8 pipelined steps and the
    # per-block VMEM stays within v7x's 64 MiB.
    cparams = pltpu.CompilerParams(
        dimension_semantics=("parallel",),
        vmem_limit_bytes=32 * 1024 * 1024,
    )

    # Advisory cost estimates: let XLA overlap the tiny per-channel BN-combine
    # glue with the kernels.
    ce1 = pl.CostEstimate(
        flops=2 * N * H * W * (KH * KW * Cin) * Cp,
        transcendentals=0,
        bytes_accessed=(N * Hp * Wp * Cin * 2 + KH * KW * Cin * Cp * 2
                        + Cp * 4 + N * Hp * Wp * Cp * 2 + N * 2 * Cp * 4),
    )
    ce2 = pl.CostEstimate(
        flops=2 * N * H * W * (KH * KW * Cp) * Cp,
        transcendentals=N * Hp * Wp * Cp,
        bytes_accessed=(N * Hp * Wp * Cp * 2 + 2 * Cp * 4
                        + KH * KW * Cp * Cp * 2 + Cp * 4
                        + N * H * W * Cp * 4),
    )

    # ---- kernel 1: conv1 + per-tile BN stats (per-batch partials keep the
    #      batch axis "parallel"; global combine is tiny per-channel math).
    hpad, stats = pl.pallas_call(
        conv1_stats_kernel,
        out_shape=(
            jax.ShapeDtypeStruct((N, Hp, Wp, Cp), jnp.bfloat16),
            jax.ShapeDtypeStruct((N, 2, Cp), jnp.float32),
        ),
        grid_spec=pltpu.PrefetchScalarGridSpec(
            num_scalar_prefetch=0,
            grid=(N,),
            in_specs=[
                pl.BlockSpec((1, Hp, Wp, Cin), lambda n: (n, 0, 0, 0)),
                pl.BlockSpec((KH * KW * Cin, Cp), lambda n: (0, 0)),
                pl.BlockSpec((1, Cp), lambda n: (0, 0)),
            ],
            out_specs=(
                pl.BlockSpec((1, Hp, Wp, Cp), lambda n: (n, 0, 0, 0)),
                pl.BlockSpec((1, 2, Cp), lambda n: (n, 0, 0)),
            ),
        ),
        compiler_params=cparams,
        cost_estimate=ce1,
    )(xp, w1p, b1p)

    # ---- finalize global BN statistics (Chan's parallel-variance combine;
    #      per-channel (Cp,)-sized math — negligible glue).
    means = stats[:, 0, :]                       # (N, Cp) per-tile means
    m2s = stats[:, 1, :]                         # (N, Cp) per-tile M2
    cnt_tile = jnp.float32(H * W)
    total = jnp.float32(N * H * W)
    mean = jnp.mean(means, axis=0)
    m2 = jnp.sum(m2s, axis=0) + cnt_tile * jnp.sum(jnp.square(means - mean), axis=0)
    var = m2 / total                             # biased var (BN training forward)
    inv_std = lax.rsqrt(var + BN_EPS)
    scale = (gammap * inv_std).reshape(1, Cp)
    shift = (betap - mean * gammap * inv_std).reshape(1, Cp)

    # ---- kernel 2: fused BN-apply + GELU + conv2 (reads the pre-padded bf16
    #      intermediate directly: no XLA pad op, no f32 HBM round-trip).
    outp = pl.pallas_call(
        bn_gelu_conv2_kernel,
        out_shape=jax.ShapeDtypeStruct((N, H, W, Cp), jnp.float32),
        grid_spec=pltpu.PrefetchScalarGridSpec(
            num_scalar_prefetch=0,
            grid=(N,),
            in_specs=[
                pl.BlockSpec((1, Hp, Wp, Cp), lambda n: (n, 0, 0, 0)),
                pl.BlockSpec((1, Cp), lambda n: (0, 0)),
                pl.BlockSpec((1, Cp), lambda n: (0, 0)),
                pl.BlockSpec((KH * KW * Cp, Cp), lambda n: (0, 0)),
                pl.BlockSpec((1, Cp), lambda n: (0, 0)),
            ],
            out_specs=pl.BlockSpec((1, H, W, Cp), lambda n: (n, 0, 0, 0)),
        ),
        compiler_params=cparams,
        cost_estimate=ce2,
    )(hpad, scale, shift, w2p, b2p)

    # Strip channel padding, back to NCHW (kept in f32 to preserve the f32
    # accumulator precision of the final conv).
    # TODO(synk): for large shapes, emit a bf16 / lane-dense fused writeback
    # to avoid the padded-f32 epilogue round trip through HBM.
    return jnp.transpose(outp[..., :Cout], (0, 3, 1, 2))


def init_params(key, in_channels, out_channels):
    """Deterministic synthetic parameters (PyTorch-default-like uniform init)."""
    k1, k2, k3, k4 = jax.random.split(key, 4)
    fan1 = in_channels * KH * KW
    bound1 = 1.0 / math.sqrt(fan1)
    # conv weights stored as (kh*kw, Cin, Cout): tap t = dy*KW + dx.
    w1 = jax.random.uniform(k1, (KH * KW, in_channels, out_channels),
                            jnp.float32, -bound1, bound1)
    b1 = jax.random.uniform(k2, (out_channels,), jnp.float32, -bound1, bound1)
    fan2 = out_channels * KH * KW
    bound2 = 1.0 / math.sqrt(fan2)
    w2 = jax.random.uniform(k3, (KH * KW, out_channels, out_channels),
                            jnp.float32, -bound2, bound2)
    b2 = jax.random.uniform(k4, (out_channels,), jnp.float32, -bound2, bound2)
    gamma = jnp.ones((out_channels,), jnp.float32)   # BN weight init
    beta = jnp.zeros((out_channels,), jnp.float32)   # BN bias init
    return w1, b1, gamma, beta, w2, b2


if __name__ == "__main__":
    key = jax.random.PRNGKey(0)
    kx, kp = jax.random.split(key)

    N, Cin, H, W = 2, 4, 16, 16   # small NCHW input, as in PyTorch convention
    Cout = 8

    x = jax.random.normal(kx, (N, Cin, H, W), jnp.float32)
    params = init_params(kp, Cin, Cout)

    y = basic_conv_block(x, params)
    jax.block_until_ready(y)

    assert y.shape == (N, Cout, H, W), y.shape
    assert jnp.all(jnp.isfinite(y))
    print("KERNEL_OK")
</pallas_src>

<mosaic_0001>
module attributes {stable_mosaic.version = 11 : i64} {
  func.func @conv1_stats_kernel(%arg0: i32, %arg1: memref<1x18x18x4xbf16, #tpu.memory_space<vmem>>, %arg2: memref<36x128xbf16, #tpu.memory_space<vmem>>, %arg3: memref<1x128xf32, #tpu.memory_space<vmem>>, %arg4: memref<1x18x18x128xbf16, #tpu.memory_space<vmem>>, %arg5: memref<1x2x128xf32, #tpu.memory_space<vmem>>) attributes {dimension_semantics = [#tpu.dimension_semantics<parallel>], iteration_bounds = array<i64: 2>, scalar_prefetch = 0 : i64, scratch_operands = 0 : i64, tpu.core_type = #tpu.core_type<tc>, window_params = [{transform_indices = @transform_0, window_bounds = array<i64: 1, 18, 18, 4>}, {pipeline_mode = #tpu.pipeline_mode<synchronous>, transform_indices = @transform_1, window_bounds = array<i64: 36, 128>}, {pipeline_mode = #tpu.pipeline_mode<synchronous>, transform_indices = @transform_2, window_bounds = array<i64: 1, 128>}, {transform_indices = @transform_3, window_bounds = array<i64: 1, 18, 18, 128>}, {transform_indices = @transform_4, window_bounds = array<i64: 1, 2, 128>}]} {
    %c0 = arith.constant 0 : index
    %c0_0 = arith.constant 0 : index
    %c0_1 = arith.constant 0 : index
    %c0_2 = arith.constant 0 : index
    %0 = vector.load %arg1[%c0, %c0_0, %c0_1, %c0_2] : memref<1x18x18x4xbf16, #tpu.memory_space<vmem>>, vector<1x18x18x4xbf16>
    %1 = vector.shape_cast %0 : vector<1x18x18x4xbf16> to vector<18x18x4xbf16>
    %2 = vector.extract_strided_slice %1 {offsets = [0, 0, 0], sizes = [16, 16, 4], strides = [1, 1, 1]} : vector<18x18x4xbf16> to vector<16x16x4xbf16>
    %3 = vector.shape_cast %2 : vector<16x16x4xbf16> to vector<256x4xbf16>
    %4 = vector.extract_strided_slice %1 {offsets = [0, 1, 0], sizes = [16, 16, 4], strides = [1, 1, 1]} : vector<18x18x4xbf16> to vector<16x16x4xbf16>
    %5 = vector.shape_cast %4 : vector<16x16x4xbf16> to vector<256x4xbf16>
    %6 = vector.extract_strided_slice %1 {offsets = [0, 2, 0], sizes = [16, 16, 4], strides = [1, 1, 1]} : vector<18x18x4xbf16> to vector<16x16x4xbf16>
    %7 = vector.shape_cast %6 : vector<16x16x4xbf16> to vector<256x4xbf16>
    %8 = vector.extract_strided_slice %1 {offsets = [1, 0, 0], sizes = [16, 16, 4], strides = [1, 1, 1]} : vector<18x18x4xbf16> to vector<16x16x4xbf16>
    %9 = vector.shape_cast %8 : vector<16x16x4xbf16> to vector<256x4xbf16>
    %10 = vector.extract_strided_slice %1 {offsets = [1, 1, 0], sizes = [16, 16, 4], strides = [1, 1, 1]} : vector<18x18x4xbf16> to vector<16x16x4xbf16>
    %11 = vector.shape_cast %10 : vector<16x16x4xbf16> to vector<256x4xbf16>
    %12 = vector.extract_strided_slice %1 {offsets = [1, 2, 0], sizes = [16, 16, 4], strides = [1, 1, 1]} : vector<18x18x4xbf16> to vector<16x16x4xbf16>
    %13 = vector.shape_cast %12 : vector<16x16x4xbf16> to vector<256x4xbf16>
    %14 = vector.extract_strided_slice %1 {offsets = [2, 0, 0], sizes = [16, 16, 4], strides = [1, 1, 1]} : vector<18x18x4xbf16> to vector<16x16x4xbf16>
    %15 = vector.shape_cast %14 : vector<16x16x4xbf16> to vector<256x4xbf16>
    %16 = vector.extract_strided_slice %1 {offsets = [2, 1, 0], sizes = [16, 16, 4], strides = [1, 1, 1]} : vector<18x18x4xbf16> to vector<16x16x4xbf16>
    %17 = vector.shape_cast %16 : vector<16x16x4xbf16> to vector<256x4xbf16>
    %18 = vector.extract_strided_slice %1 {offsets = [2, 2, 0], sizes = [16, 16, 4], strides = [1, 1, 1]} : vector<18x18x4xbf16> to vector<16x16x4xbf16>
    %19 = vector.shape_cast %18 : vector<16x16x4xbf16> to vector<256x4xbf16>
    %20 = tpu.concatenate %3, %5, %7, %9, %11, %13, %15, %17, %19 in 1 : vector<256x4xbf16>, vector<256x4xbf16>, vector<256x4xbf16>, vector<256x4xbf16>, vector<256x4xbf16>, vector<256x4xbf16>, vector<256x4xbf16>, vector<256x4xbf16>, vector<256x4xbf16> -> vector<256x36xbf16>
    %c0_3 = arith.constant 0 : index
    %c0_4 = arith.constant 0 : index
    %21 = vector.load %arg2[%c0_3, %c0_4] : memref<36x128xbf16, #tpu.memory_space<vmem>>, vector<36x128xbf16>
    %cst = arith.constant dense<0.000000e+00> : vector<256x128xf32>
    %22 = tpu.matmul %20, %21, %cst {dimension_numbers = #tpu.dot_dimension_numbers<[1], [0], [0], [1], [0, 0, 1, 1], [], []>} : vector<256x36xbf16>, vector<36x128xbf16>, vector<256x128xf32> -> vector<256x128xf32>
    %c0_5 = arith.constant 0 : index
    %c0_6 = arith.constant 0 : index
    %23 = vector.load %arg3[%c0_5, %c0_6] : memref<1x128xf32, #tpu.memory_space<vmem>>, vector<1x128xf32>
    %24 = vector.broadcast %23 : vector<1x128xf32> to vector<256x128xf32>
    %25 = arith.addf %22, %24 : vector<256x128xf32>
    %cst_7 = arith.constant dense<0.000000e+00> : vector<128xf32>
    %26 = vector.multi_reduction <add>, %25, %cst_7 [0] : vector<256x128xf32> to vector<128xf32>
    %27 = vector.shape_cast %26 : vector<128xf32> to vector<1x128xf32>
    %cst_8 = arith.constant 2.560000e+02 : f32
    %28 = vector.broadcast %cst_8 : f32 to vector<1x128xf32>
    %29 = arith.divf %27, %28 : vector<1x128xf32>
    %30 = vector.broadcast %29 : vector<1x128xf32> to vector<256x128xf32>
    %31 = arith.subf %25, %30 : vector<256x128xf32>
    %32 = arith.mulf %31, %31 : vector<256x128xf32>
    %cst_9 = arith.constant dense<0.000000e+00> : vector<128xf32>
    %33 = vector.multi_reduction <add>, %32, %cst_9 [0] : vector<256x128xf32> to vector<128xf32>
    %34 = vector.shape_cast %33 : vector<128xf32> to vector<1x128xf32>
    %c0_10 = arith.constant 0 : index
    %c0_11 = arith.constant 0 : index
    %c0_12 = arith.constant 0 : index
    %35 = vector.load %arg5[%c0_10, %c0_11, %c0_12] : memref<1x2x128xf32, #tpu.memory_space<vmem>>, vector<1x1x128xf32>
    %36 = vector.shape_cast %35 : vector<1x1x128xf32> to vector<1x128xf32>
    %37 = vector.shape_cast %29 : vector<1x128xf32> to vector<1x1x128xf32>
    tpu.vector_store %arg5[%c0_10, %c0_11, %c0_12], %37 {strides = array<i32>} : memref<1x2x128xf32, #tpu.memory_space<vmem>>, vector<1x1x128xf32>,
    %c0_13 = arith.constant 0 : index
    %c1 = arith.constant 1 : index
    %c0_14 = arith.constant 0 : index
    %38 = vector.load %arg5[%c0_13, %c1, %c0_14] : memref<1x2x128xf32, #tpu.memory_space<vmem>>, vector<1x1x128xf32>
    %39 = vector.shape_cast %38 : vector<1x1x128xf32> to vector<1x128xf32>
    %40 = vector.shape_cast %34 : vector<1x128xf32> to vector<1x1x128xf32>
    tpu.vector_store %arg5[%c0_13, %c1, %c0_14], %40 {strides = array<i32>} : memref<1x2x128xf32, #tpu.memory_space<vmem>>, vector<1x1x128xf32>,
    %41 = arith.truncf %25 : vector<256x128xf32> to vector<256x128xbf16>
    %42 = vector.shape_cast %41 : vector<256x128xbf16> to vector<16x16x128xbf16>
    %c0_15 = arith.constant 0 : index
    %c1_16 = arith.constant 1 : index
    %c1_17 = arith.constant 1 : index
    %c0_18 = arith.constant 0 : index
    %43 = vector.load %arg4[%c0_15, %c1_16, %c1_17, %c0_18] : memref<1x18x18x128xbf16, #tpu.memory_space<vmem>>, vector<1x16x16x128xbf16>
    %44 = vector.shape_cast %43 : vector<1x16x16x128xbf16> to vector<16x16x128xbf16>
    %45 = vector.shape_cast %42 : vector<16x16x128xbf16> to vector<1x16x16x128xbf16>
    tpu.vector_store %arg4[%c0_15, %c1_16, %c1_17, %c0_18], %45 {strides = array<i32>} : memref<1x18x18x128xbf16, #tpu.memory_space<vmem>>, vector<1x16x16x128xbf16>,
    return
  }
  func.func @transform_0(%arg0: i32) -> (i32, i32, i32, i32) {
    %c0_i32 = arith.constant 0 : i32
    %c0_i32_0 = arith.constant 0 : i32
    %c0_i32_1 = arith.constant 0 : i32
    %c0_i32_2 = arith.constant 0 : i32
    return %arg0, %c0_i32, %c0_i32_0, %c0_i32_1 : i32, i32, i32, i32
  }
  func.func @transform_1(%arg0: i32) -> (i32, i32) {
    %c0_i32 = arith.constant 0 : i32
    %c0_i32_0 = arith.constant 0 : i32
    %c0_i32_1 = arith.constant 0 : i32
    return %c0_i32, %c0_i32_0 : i32, i32
  }
  func.func @transform_2(%arg0: i32) -> (i32, i32) {
    %c0_i32 = arith.constant 0 : i32
    %c0_i32_0 = arith.constant 0 : i32
    %c0_i32_1 = arith.constant 0 : i32
    return %c0_i32, %c0_i32_0 : i32, i32
  }
  func.func @transform_3(%arg0: i32) -> (i32, i32, i32, i32) {
    %c0_i32 = arith.constant 0 : i32
    %c0_i32_0 = arith.constant 0 : i32
    %c0_i32_1 = arith.constant 0 : i32
    %c0_i32_2 = arith.constant 0 : i32
    return %arg0, %c0_i32, %c0_i32_0, %c0_i32_1 : i32, i32, i32, i32
  }
  func.func @transform_4(%arg0: i32) -> (i32, i32, i32) {
    %c0_i32 = arith.constant 0 : i32
    %c0_i32_0 = arith.constant 0 : i32
    %c0_i32_1 = arith.constant 0 : i32
    return %arg0, %c0_i32, %c0_i32_0 : i32, i32, i32
  }
}

</mosaic_0001>

<llo_original>
// kernel: tpu_custom_call.1
$region0: #{tpu_custom_call.1}
  #allocation0 [shape = 'u32[]', space=smem, size = 0x4, offset = 0x4, fixed_abs, tag = 'smem constant byte address 0x4 - core index']
  #allocation1 [shape = 'u32[144,128]{1,0:T(1,128)}', space=vmem, size = 0x12000, scoped, tag = 'internal scratch']
  %s0 = inlined_call_operand.vmem [shape: bf16[2,18,18,4], index: 0, kind: input, shape index: {}]
  %s1 = inlined_call_operand.vmem [shape: bf16[36,128], index: 1, kind: input, shape index: {}]
  %s2 = inlined_call_operand.vmem [shape: f32[1,128], index: 2, kind: input, shape index: {}]
  %s3 = inlined_call_operand.vmem [shape: bf16[2,18,18,128], index: 3, kind: output, shape index: {0}]
  %s4 = inlined_call_operand.hbm [shape: f32[2,2,128], index: 4, kind: output, shape index: {1}]
  %5 = xla_tuple %s3, %s4
  %s6 = sld [smem:[#allocation0]]
  $region53: #{tpu_custom_call.1} parent=0
    _
  %s8 = ssub.s32 1, %s6
  %s9 = scalar_select 0, %s8, %s6
  $region1: #{tpu_custom_call.1} parent=0
    #allocation2 [shape = 'u8[2048]{0}', space=vmem, size = 0x800, scoped, tag = 'output window, operand 1']
    #allocation3 [shape = 's32[2]{0}', space=sflag, size = 0x8, scoped, tag = 'scoped memory for tpu_custom_call.1']
    %10 = vsyncpa [#allocation3], 0
    %s11 = scalar_lea.sflag [#allocation3], 1
    %12 = vsyncpa %s11, 0
    loop: start=0, step=1, limit=4
    $region2: #{tpu_custom_call.1} parent=1 // loop_pre_header
      _
    $region3: #{tpu_custom_call.1} parent=1 // loop_header
      %s14 = sphi 0, %s18
      %p15 = scmp.ge.s32.totalorder %s14, 4
      %s24 = sphi 0, %s26
      %s27 = sphi 0, %s24
      %s28 = sphi 0, %s27
      %s44 = sphi 0, %s28
      %s48 = sphi 0, %s48
      %s50 = sphi 0, %s48
      %s51 = sphi 0, %s50
      %s65 = sphi 0, %s51
      %s69 = sphi 0, %s69
      %s71 = sphi 0, %s69
      %s72 = sphi 0, %s71
      %s86 = sphi 0, %s72
      %s92 = sphi 0, %s94
      %s95 = sphi 0, %s92
      %s96 = sphi 0, %s95
      %s112 = sphi 0, %s96
      %s118 = sphi 0, %s120
      %s121 = sphi 0, %s118
      %s122 = sphi 0, %s121
      %s138 = sphi 0, %s122
    $region4: #{tpu_custom_call.1} parent=1 // loop_header_branch
      %17 = sbr.rel (%p15) target = $region8
    $region5: #{tpu_custom_call.1} parent=1 // loop_body
      %s19 = ssub.s32 %s14, 1
      %s20 = ssub.s32 %s14, 2
      %s21 = sadd.s32 %s14, 1
      %s22 = ssub.s32 %s14, %s21
      %p23 = scmp.eq.s32.totalorder %s22, 0
      %s25 = sadd.s32 %s24, 1
      %s26 = scalar_select %p23, %s24, %s25
      %p29 = pneg %p23
      %p30 = scmp.eq.s32.totalorder %s14, 1
      %p31 = por %p29, %p30
      %p32 = scmp.ne.s32.totalorder %s24, %s27
      %p33 = scmp.eq.s32.totalorder %s14, 0
      %p34 = por %p32, %p33
      %p35 = scmp.ne.s32.totalorder %s24, %s27
      %p36 = scmp.eq.s32.totalorder %s19, 1
      %p37 = por %p35, %p36
      %p38 = scmp.ne.s32.totalorder %s27, %s28
      %p39 = scmp.eq.s32.totalorder %s19, 0
      %p40 = por %p38, %p39
      %p41 = scmp.ne.s32.totalorder %s27, %s28
      %p42 = scmp.eq.s32.totalorder %s20, 1
      %p43 = por %p41, %p42
      %p45 = scmp.ne.s32.totalorder %s28, %s44
      %p46 = scmp.eq.s32.totalorder %s20, 0
      %p47 = por %p45, %p46
      %s49 = sadd.s32 %s48, 1
      %p52 = scmp.eq.s32.totalorder %s14, 1
      %p53 = scmp.ne.s32.totalorder %s48, %s50
      %p54 = scmp.eq.s32.totalorder %s14, 0
      %p55 = por %p53, %p54
      %p56 = scmp.ne.s32.totalorder %s48, %s50
      %p57 = scmp.eq.s32.totalorder %s19, 1
      %p58 = por %p56, %p57
      %p59 = scmp.ne.s32.totalorder %s50, %s51
      %p60 = scmp.eq.s32.totalorder %s19, 0
      %p61 = por %p59, %p60
      %p62 = scmp.ne.s32.totalorder %s50, %s51
      %p63 = scmp.eq.s32.totalorder %s20, 1
      %p64 = por %p62, %p63
      %p66 = scmp.ne.s32.totalorder %s51, %s65
      %p67 = scmp.eq.s32.totalorder %s20, 0
      %p68 = por %p66, %p67
      %s70 = sadd.s32 %s69, 1
      %p73 = scmp.eq.s32.totalorder %s14, 1
      %p74 = scmp.ne.s32.totalorder %s69, %s71
      %p75 = scmp.eq.s32.totalorder %s14, 0
      %p76 = por %p74, %p75
      %p77 = scmp.ne.s32.totalorder %s69, %s71
      %p78 = scmp.eq.s32.totalorder %s19, 1
      %p79 = por %p77, %p78
      %p80 = scmp.ne.s32.totalorder %s71, %s72
      %p81 = scmp.eq.s32.totalorder %s19, 0
      %p82 = por %p80, %p81
      %p83 = scmp.ne.s32.totalorder %s71, %s72
      %p84 = scmp.eq.s32.totalorder %s20, 1
      %p85 = por %p83, %p84
      %p87 = scmp.ne.s32.totalorder %s72, %s86
      %p88 = scmp.eq.s32.totalorder %s20, 0
      %p89 = por %p87, %p88
      %s90 = ssub.s32 %s14, %s21
      %p91 = scmp.eq.s32.totalorder %s90, 0
      %s93 = sadd.s32 %s92, 1
      %s94 = scalar_select %p91, %s92, %s93
      %p97 = pneg %p91
      %p98 = scmp.eq.s32.totalorder %s14, 1
      %p99 = por %p97, %p98
      %p100 = scmp.ne.s32.totalorder %s92, %s95
      %p101 = scmp.eq.s32.totalorder %s14, 0
      %p102 = por %p100, %p101
      %p103 = scmp.ne.s32.totalorder %s92, %s95
      %p104 = scmp.eq.s32.totalorder %s19, 1
      %p105 = por %p103, %p104
      %p106 = scmp.ne.s32.totalorder %s95, %s96
      %p107 = scmp.eq.s32.totalorder %s19, 0
      %p108 = por %p106, %p107
      %p109 = scmp.ne.s32.totalorder %s95, %s96
      %p110 = scmp.eq.s32.totalorder %s20, 1
      %p111 = por %p109, %p110
      %p113 = scmp.ne.s32.totalorder %s96, %s112
      %p114 = scmp.eq.s32.totalorder %s20, 0
      %p115 = por %p113, %p114
      %s116 = ssub.s32 %s14, %s21
      %p117 = scmp.eq.s32.totalorder %s116, 0
      %s119 = sadd.s32 %s118, 1
      %s120 = scalar_select %p117, %s118, %s119
      %p123 = pneg %p117
      %p124 = scmp.eq.s32.totalorder %s14, 1
      %p125 = por %p123, %p124
      %p126 = scmp.ne.s32.totalorder %s118, %s121
      %p127 = scmp.eq.s32.totalorder %s14, 0
      %p128 = por %p126, %p127
      %p129 = scmp.ne.s32.totalorder %s118, %s121
      %p130 = scmp.eq.s32.totalorder %s19, 1
      %p131 = por %p129, %p130
      %p132 = scmp.ne.s32.totalorder %s121, %s122
      %p133 = scmp.eq.s32.totalorder %s19, 0
      %p134 = por %p132, %p133
      %p135 = scmp.ne.s32.totalorder %s121, %s122
      %p136 = scmp.eq.s32.totalorder %s20, 1
      %p137 = por %p135, %p136
      %p139 = scmp.ne.s32.totalorder %s122, %s138
      %p140 = scmp.eq.s32.totalorder %s20, 0
      %p141 = por %p139, %p140
      %p142 = scmp.le.s32.totalorder 1, %s14
      %p143 = scmp.lt.s32.totalorder %s14, 3
      %p144 = pnand %p142, %p143
      %p145 = pneg %p144
      // Predicated region
      $region9: #{tpu_custom_call.1} parent=5 // pred_check
        _
      $region10: #{tpu_custom_call.1} parent=5 // pred_check_branch
        %147 = sbr.rel (%p144) target = $region12
      $region11: #{tpu_custom_call.1} parent=5 // pred_region
        %s148 = ssub.s32 %s14, 1
        // Predicated region
        $region13: #{tpu_custom_call.1} parent=11 // pred_check
          %p149 = pneg %p61
        $region14: #{tpu_custom_call.1} parent=11 // pred_check_branch
          %151 = sbr.rel (%p149) target = $region16
        $region15: #{tpu_custom_call.1} parent=11 // pred_region
          _
        $region16: #{tpu_custom_call.1} parent=11 // pred_fallthru
          _
        // Predicated region
        $region17: #{tpu_custom_call.1} parent=11 // pred_check
          %p152 = pneg %p82
        $region18: #{tpu_custom_call.1} parent=11 // pred_check_branch
          %154 = sbr.rel (%p152) target = $region20
        $region19: #{tpu_custom_call.1} parent=11 // pred_region
          _
        $region20: #{tpu_custom_call.1} parent=11 // pred_fallthru
          _
      $region12: #{tpu_custom_call.1} parent=5 // pred_fallthru
        _
      %p155 = scmp.lt.s32.totalorder %s14, 2
      // Predicated region
      $region21: #{tpu_custom_call.1} parent=5 // pred_check
        %p156 = pneg %p155
      $region22: #{tpu_custom_call.1} parent=5 // pred_check_branch
        %158 = sbr.rel (%p156) target = $region24
      $region23: #{tpu_custom_call.1} parent=5 // pred_region
        // Predicated region
        $region25: #{tpu_custom_call.1} parent=23 // pred_check
          %p159 = pneg %p34
        $region26: #{tpu_custom_call.1} parent=23 // pred_check_branch
          %161 = sbr.rel (%p159) target = $region28
        $region27: #{tpu_custom_call.1} parent=23 // pred_region
          %p162 = scmp.lt.s32.totalorder %s14, 1
          %s163 = scalar_select %p162, %s14, 1
          %s164 = smul.addr %s163, 54
          %s165 = smul.addr %s164, 4
          %s166 = scalar_lea.vmem %s0, %s165
        $region28: #{tpu_custom_call.1} parent=23 // pred_fallthru
          _
      $region24: #{tpu_custom_call.1} parent=5 // pred_fallthru
        _
      %p167 = scmp.le.s32.totalorder 1, %s14
      %p168 = scmp.lt.s32.totalorder %s14, 3
      %p169 = pnand %p167, %p168
      %p170 = pneg %p169
      // Predicated region
      $region29: #{tpu_custom_call.1} parent=5 // pred_check
        _
      $region30: #{tpu_custom_call.1} parent=5 // pred_check_branch
        %172 = sbr.rel (%p169) target = $region32
      $region31: #{tpu_custom_call.1} parent=5 // pred_region
        %s173 = ssub.s32 %s14, 1
        %p174 = scmp.lt.s32.totalorder %s19, 1
        %s175 = scalar_select %p174, %s19, 1
        %s176 = smul.addr %s175, 54
        %s177 = smul.addr %s176, 4
        %s178 = scalar_lea.vmem %s0, %s177
        %p179 = pneg %p40
        %p180 = pneg %p37
        %p181 = pneg %p61
        %p182 = pneg %p58
        %p183 = pneg %p82
        %p184 = pneg %p79
        %p185 = pneg %p108
        %p186 = pneg %p105
        %p187 = scmp.lt.s32.totalorder %s19, 1
        %s188 = scalar_select %p187, %s19, 1
        %s189 = smul.addr %s188, 54
        %s190 = smul.addr %s189, 4
        %s191 = scalar_lea.vmem %s3, %s190
        %p192 = pneg %p134
        %p193 = pneg %p131
        %s194 = sand.u32 %s121, 1
        %s195 = scalar_lea.sflag [#allocation3], %s194
        %s196 = sand.u32 %s121, 1
        %s197 = smul.addr %s196, 2
        %s198 = scalar_lea.vmem [#allocation2], %s197
        %p199 = scmp.lt.s32.totalorder %s19, 1
        %s200 = scalar_select %p199, %s19, 1
        %s201 = smul.addr %s200, 54
        %s202 = smul.addr %s201, 4
        %s203 = scalar_lea.vmem %s0, %s202
        %p204 = scmp.lt.s32.totalorder %s19, 1
        %s205 = scalar_select %p204, %s19, 1
        %s206 = smul.addr %s205, 54
        %s207 = smul.addr %s206, 4
        %s208 = scalar_lea.vmem %s3, %s207
        %v210 = vld [vmem:[%s203] sm:$0xf]
        %v211 = vld [vmem:[%s203 + $0x4] sm:$0xf]
        %v212 = vld [vmem:[%s203 + $0x8] sm:$0x1]
        %v213 = vld [vmem:[%s203 + $0xc] sm:$0xf]
        %v214 = vld [vmem:[%s203 + $0x10] sm:$0xf]
        %v215 = vld [vmem:[%s203 + $0x14] sm:$0x1]
        %v216 = vld [vmem:[%s203 + $0x18] sm:$0xf]
        %v217 = vld [vmem:[%s203 + $0x1c] sm:$0xf]
        %v218 = vld [vmem:[%s203 + $0x20] sm:$0x1]
        %v219 = vld [vmem:[%s203 + $0x24] sm:$0xf]
        %v220 = vld [vmem:[%s203 + $0x28] sm:$0xf]
        %v221 = vld [vmem:[%s203 + $0x2c] sm:$0x1]
        %v222 = vld [vmem:[%s203 + $0x30] sm:$0xf]
        %v223 = vld [vmem:[%s203 + $0x34] sm:$0xf]
        %v224 = vld [vmem:[%s203 + $0x38] sm:$0x1]
        %v225 = vld [vmem:[%s203 + $0x3c] sm:$0xf]
        %v226 = vld [vmem:[%s203 + $0x40] sm:$0xf]
        %v227 = vld [vmem:[%s203 + $0x44] sm:$0x1]
        %v228 = vld [vmem:[%s203 + $0x48] sm:$0xf]
        %v229 = vld [vmem:[%s203 + $0x4c] sm:$0xf]
        %v230 = vld [vmem:[%s203 + $0x50] sm:$0x1]
        %v231 = vld [vmem:[%s203 + $0x54] sm:$0xf]
        %v232 = vld [vmem:[%s203 + $0x58] sm:$0xf]
        %v233 = vld [vmem:[%s203 + $0x5c] sm:$0x1]
        %v234 = vld [vmem:[%s203 + $0x60] sm:$0xf]
        %v235 = vld [vmem:[%s203 + $0x64] sm:$0xf]
        %v236 = vld [vmem:[%s203 + $0x68] sm:$0x1]
        %v237 = vld [vmem:[%s203 + $0x6c] sm:$0xf]
        %v238 = vld [vmem:[%s203 + $0x70] sm:$0xf]
        %v239 = vld [vmem:[%s203 + $0x74] sm:$0x1]
        %v240 = vld [vmem:[%s203 + $0x78] sm:$0xf]
        %v241 = vld [vmem:[%s203 + $0x7c] sm:$0xf]
        %v242 = vld [vmem:[%s203 + $0x80] sm:$0x1]
        %v243 = vld [vmem:[%s203 + $0x84] sm:$0xf]
        %v244 = vld [vmem:[%s203 + $0x88] sm:$0xf]
        %v245 = vld [vmem:[%s203 + $0x8c] sm:$0x1]
        %v246 = vld [vmem:[%s203 + $0x90] sm:$0xf]
        %v247 = vld [vmem:[%s203 + $0x94] sm:$0xf]
        %v248 = vld [vmem:[%s203 + $0x98] sm:$0x1]
        %v249 = vld [vmem:[%s203 + $0x9c] sm:$0xf]
        %v250 = vld [vmem:[%s203 + $0xa0] sm:$0xf]
        %v251 = vld [vmem:[%s203 + $0xa4] sm:$0x1]
        %v252 = vld [vmem:[%s203 + $0xa8] sm:$0xf]
        %v253 = vld [vmem:[%s203 + $0xac] sm:$0xf]
        %v254 = vld [vmem:[%s203 + $0xb0] sm:$0x1]
        %v255 = vld [vmem:[%s203 + $0xb4] sm:$0xf]
        %v256 = vld [vmem:[%s203 + $0xb8] sm:$0xf]
        %v257 = vld [vmem:[%s203 + $0xbc] sm:$0x1]
        %v258 = vld [vmem:[%s203 + $0xc0] sm:$0xf]
        %v259 = vld [vmem:[%s203 + $0xc4] sm:$0xf]
        %v260 = vld [vmem:[%s203 + $0xc8] sm:$0x1]
        %v261 = vld [vmem:[%s203 + $0xcc] sm:$0xf]
        %v262 = vld [vmem:[%s203 + $0xd0] sm:$0xf]
        %v263 = vld [vmem:[%s203 + $0xd4] sm:$0x1]
        %vm264 = vsmask.f32 3328
        %vm265 = vsmask.f32 7440
        %vm266 = vmor %vm264, %vm265
        %v268 = vshrl.u32 %v210, 16
        %v270 = vrot.slane %v268, 4
        %v271 = vshll.u32 %v210, 16
        %v273 = vrot.slane %v271, 5
        %v274 = vor.u32 %v270, %v273
        %v275 = vrot.slane %v274, 4
        %v277 = vshll.u32 %v211, 16
        %v279 = vrot.slane %v277, 5
        %v280 = vsel %vm266, %v275, %v279
        %v281 = vshrl.u32 %v211, 16
        %v283 = vrot.slane %v281, 4
        %v284 = vor.u32 %v283, %v279
        %v285 = vrot.slane %v284, 4
        %v287 = vshll.u32 %v212, 16
        %v289 = vrot.slane %v287, 5
        %v290 = vsel %vm266, %v285, %v289
        %v292 = vshrl.u32 %v213, 16
        %v294 = vrot.slane %v292, 4
        %v295 = vshll.u32 %v213, 16
        %v297 = vrot.slane %v295, 5
        %v298 = vor.u32 %v294, %v297
        %v299 = vrot.slane %v298, 4
        %v301 = vshll.u32 %v214, 16
        %v303 = vrot.slane %v301, 5
        %v304 = vsel %vm266, %v299, %v303
        %v305 = vshrl.u32 %v214, 16
        %v307 = vrot.slane %v305, 4
        %v308 = vor.u32 %v307, %v303
        %v309 = vrot.slane %v308, 4
        %v311 = vshll.u32 %v215, 16
        %v313 = vrot.slane %v311, 5
        %v314 = vsel %vm266, %v309, %v313
        %v316 = vshrl.u32 %v216, 16
        %v318 = vrot.slane %v316, 4
        %v319 = vshll.u32 %v216, 16
        %v321 = vrot.slane %v319, 5
        %v322 = vor.u32 %v318, %v321
        %v323 = vrot.slane %v322, 4
        %v325 = vshll.u32 %v217, 16
        %v327 = vrot.slane %v325, 5
        %v328 = vsel %vm266, %v323, %v327
        %v329 = vshrl.u32 %v217, 16
        %v331 = vrot.slane %v329, 4
        %v332 = vor.u32 %v331, %v327
        %v333 = vrot.slane %v332, 4
        %v335 = vshll.u32 %v218, 16
        %v337 = vrot.slane %v335, 5
        %v338 = vsel %vm266, %v333, %v337
        %v340 = vshrl.u32 %v219, 16
        %v342 = vrot.slane %v340, 4
        %v343 = vshll.u32 %v219, 16
        %v345 = vrot.slane %v343, 5
        %v346 = vor.u32 %v342, %v345
        %v347 = vrot.slane %v346, 4
        %v349 = vshll.u32 %v220, 16
        %v351 = vrot.slane %v349, 5
        %v352 = vsel %vm266, %v347, %v351
        %v353 = vshrl.u32 %v220, 16
        %v355 = vrot.slane %v353, 4
        %v356 = vor.u32 %v355, %v351
        %v357 = vrot.slane %v356, 4
        %v359 = vshll.u32 %v221, 16
        %v361 = vrot.slane %v359, 5
        %v362 = vsel %vm266, %v357, %v361
        %v364 = vshrl.u32 %v222, 16
        %v366 = vrot.slane %v364, 4
        %v367 = vshll.u32 %v222, 16
        %v369 = vrot.slane %v367, 5
        %v370 = vor.u32 %v366, %v369
        %v371 = vrot.slane %v370, 4
        %v373 = vshll.u32 %v223, 16
        %v375 = vrot.slane %v373, 5
        %v376 = vsel %vm266, %v371, %v375
        %v377 = vshrl.u32 %v223, 16
        %v379 = vrot.slane %v377, 4
        %v380 = vor.u32 %v379, %v375
        %v381 = vrot.slane %v380, 4
        %v383 = vshll.u32 %v224, 16
        %v385 = vrot.slane %v383, 5
        %v386 = vsel %vm266, %v381, %v385
        %v388 = vshrl.u32 %v225, 16
        %v390 = vrot.slane %v388, 4
        %v391 = vshll.u32 %v225, 16
        %v393 = vrot.slane %v391, 5
        %v394 = vor.u32 %v390, %v393
        %v395 = vrot.slane %v394, 4
        %v397 = vshll.u32 %v226, 16
        %v399 = vrot.slane %v397, 5
        %v400 = vsel %vm266, %v395, %v399
        %v401 = vshrl.u32 %v226, 16
        %v403 = vrot.slane %v401, 4
        %v404 = vor.u32 %v403, %v399
        %v405 = vrot.slane %v404, 4
        %v407 = vshll.u32 %v227, 16
        %v409 = vrot.slane %v407, 5
        %v410 = vsel %vm266, %v405, %v409
        %v412 = vshrl.u32 %v228, 16
        %v414 = vrot.slane %v412, 4
        %v415 = vshll.u32 %v228, 16
        %v417 = vrot.slane %v415, 5
        %v418 = vor.u32 %v414, %v417
        %v419 = vrot.slane %v418, 4
        %v421 = vshll.u32 %v229, 16
        %v423 = vrot.slane %v421, 5
        %v424 = vsel %vm266, %v419, %v423
        %v425 = vshrl.u32 %v229, 16
        %v427 = vrot.slane %v425, 4
        %v428 = vor.u32 %v427, %v423
        %v429 = vrot.slane %v428, 4
        %v431 = vshll.u32 %v230, 16
        %v433 = vrot.slane %v431, 5
        %v434 = vsel %vm266, %v429, %v433
        %v436 = vshrl.u32 %v231, 16
        %v438 = vrot.slane %v436, 4
        %v439 = vshll.u32 %v231, 16
        %v441 = vrot.slane %v439, 5
        %v442 = vor.u32 %v438, %v441
        %v443 = vrot.slane %v442, 4
        %v445 = vshll.u32 %v232, 16
        %v447 = vrot.slane %v445, 5
        %v448 = vsel %vm266, %v443, %v447
        %v449 = vshrl.u32 %v232, 16
        %v451 = vrot.slane %v449, 4
        %v452 = vor.u32 %v451, %v447
        %v453 = vrot.slane %v452, 4
        %v455 = vshll.u32 %v233, 16
        %v457 = vrot.slane %v455, 5
        %v458 = vsel %vm266, %v453, %v457
        %v460 = vshrl.u32 %v234, 16
        %v462 = vrot.slane %v460, 4
        %v463 = vshll.u32 %v234, 16
        %v465 = vrot.slane %v463, 5
        %v466 = vor.u32 %v462, %v465
        %v467 = vrot.slane %v466, 4
        %v469 = vshll.u32 %v235, 16
        %v471 = vrot.slane %v469, 5
        %v472 = vsel %vm266, %v467, %v471
        %v473 = vshrl.u32 %v235, 16
        %v475 = vrot.slane %v473, 4
        %v476 = vor.u32 %v475, %v471
        %v477 = vrot.slane %v476, 4
        %v479 = vshll.u32 %v236, 16
        %v481 = vrot.slane %v479, 5
        %v482 = vsel %vm266, %v477, %v481
        %v484 = vshrl.u32 %v237, 16
        %v486 = vrot.slane %v484, 4
        %v487 = vshll.u32 %v237, 16
        %v489 = vrot.slane %v487, 5
        %v490 = vor.u32 %v486, %v489
        %v491 = vrot.slane %v490, 4
        %v493 = vshll.u32 %v238, 16
        %v495 = vrot.slane %v493, 5
        %v496 = vsel %vm266, %v491, %v495
        %v497 = vshrl.u32 %v238, 16
        %v499 = vrot.slane %v497, 4
        %v500 = vor.u32 %v499, %v495
        %v501 = vrot.slane %v500, 4
        %v503 = vshll.u32 %v239, 16
        %v505 = vrot.slane %v503, 5
        %v506 = vsel %vm266, %v501, %v505
        %v508 = vshrl.u32 %v240, 16
        %v510 = vrot.slane %v508, 4
        %v511 = vshll.u32 %v240, 16
        %v513 = vrot.slane %v511, 5
        %v514 = vor.u32 %v510, %v513
        %v515 = vrot.slane %v514, 4
        %v517 = vshll.u32 %v241, 16
        %v519 = vrot.slane %v517, 5
        %v520 = vsel %vm266, %v515, %v519
        %v521 = vshrl.u32 %v241, 16
        %v523 = vrot.slane %v521, 4
        %v524 = vor.u32 %v523, %v519
        %v525 = vrot.slane %v524, 4
        %v527 = vshll.u32 %v242, 16
        %v529 = vrot.slane %v527, 5
        %v530 = vsel %vm266, %v525, %v529
        %v532 = vshrl.u32 %v243, 16
        %v534 = vrot.slane %v532, 4
        %v535 = vshll.u32 %v243, 16
        %v537 = vrot.slane %v535, 5
        %v538 = vor.u32 %v534, %v537
        %v539 = vrot.slane %v538, 4
        %v541 = vshll.u32 %v244, 16
        %v543 = vrot.slane %v541, 5
        %v544 = vsel %vm266, %v539, %v543
        %v545 = vshrl.u32 %v244, 16
        %v547 = vrot.slane %v545, 4
        %v548 = vor.u32 %v547, %v543
        %v549 = vrot.slane %v548, 4
        %v551 = vshll.u32 %v245, 16
        %v553 = vrot.slane %v551, 5
        %v554 = vsel %vm266, %v549, %v553
        %v556 = vshrl.u32 %v246, 16
        %v558 = vrot.slane %v556, 4
        %v559 = vshll.u32 %v246, 16
        %v561 = vrot.slane %v559, 5
        %v562 = vor.u32 %v558, %v561
        %v563 = vrot.slane %v562, 4
        %v565 = vshll.u32 %v247, 16
        %v567 = vrot.slane %v565, 5
        %v568 = vsel %vm266, %v563, %v567
        %v569 = vshrl.u32 %v247, 16
        %v571 = vrot.slane %v569, 4
        %v572 = vor.u32 %v571, %v567
        %v573 = vrot.slane %v572, 4
        %v575 = vshll.u32 %v248, 16
        %v577 = vrot.slane %v575, 5
        %v578 = vsel %vm266, %v573, %v577
        %v580 = vshrl.u32 %v249, 16
        %v582 = vrot.slane %v580, 4
        %v583 = vshll.u32 %v249, 16
        %v585 = vrot.slane %v583, 5
        %v586 = vor.u32 %v582, %v585
        %v587 = vrot.slane %v586, 4
        %v589 = vshll.u32 %v250, 16
        %v591 = vrot.slane %v589, 5
        %v592 = vsel %vm266, %v587, %v591
        %v593 = vshrl.u32 %v250, 16
        %v595 = vrot.slane %v593, 4
        %v596 = vor.u32 %v595, %v591
        %v597 = vrot.slane %v596, 4
        %v599 = vshll.u32 %v251, 16
        %v601 = vrot.slane %v599, 5
        %v602 = vsel %vm266, %v597, %v601
        %v604 = vshrl.u32 %v252, 16
        %v606 = vrot.slane %v604, 4
        %v607 = vshll.u32 %v252, 16
        %v609 = vrot.slane %v607, 5
        %v610 = vor.u32 %v606, %v609
        %v611 = vrot.slane %v610, 4
        %v613 = vshll.u32 %v253, 16
        %v615 = vrot.slane %v613, 5
        %v616 = vsel %vm266, %v611, %v615
        %v617 = vshrl.u32 %v253, 16
        %v619 = vrot.slane %v617, 4
        %v620 = vor.u32 %v619, %v615
        %v621 = vrot.slane %v620, 4
        %v623 = vshll.u32 %v254, 16
        %v625 = vrot.slane %v623, 5
        %v626 = vsel %vm266, %v621, %v625
        %v628 = vshrl.u32 %v255, 16
        %v630 = vrot.slane %v628, 4
        %v631 = vshll.u32 %v255, 16
        %v633 = vrot.slane %v631, 5
        %v634 = vor.u32 %v630, %v633
        %v635 = vrot.slane %v634, 4
        %v637 = vshll.u32 %v256, 16
        %v639 = vrot.slane %v637, 5
        %v640 = vsel %vm266, %v635, %v639
        %v641 = vshrl.u32 %v256, 16
        %v643 = vrot.slane %v641, 4
        %v644 = vor.u32 %v643, %v639
        %v645 = vrot.slane %v644, 4
        %v647 = vshll.u32 %v257, 16
        %v649 = vrot.slane %v647, 5
        %v650 = vsel %vm266, %v645, %v649
        %vm699 = vcmask 1042432
        %vm700 = vcmask 1046532
        %vm701 = vmor %vm699, %vm700
        %v702 = vrot.slane %v210, 5
        %v703 = vrot.slane %v702, 4
        %v704 = vrot.slane %v211, 5
        %v705 = vsel %vm701, %v703, %v704
        %v706 = vrot.slane %v704, 4
        %v707 = vrot.slane %v212, 5
        %v708 = vsel %vm701, %v706, %v707
        %v709 = vrot.slane %v213, 5
        %v710 = vrot.slane %v709, 4
        %v711 = vrot.slane %v214, 5
        %v712 = vsel %vm701, %v710, %v711
        %v713 = vrot.slane %v711, 4
        %v714 = vrot.slane %v215, 5
        %v715 = vsel %vm701, %v713, %v714
        %v716 = vrot.slane %v216, 5
        %v717 = vrot.slane %v716, 4
        %v718 = vrot.slane %v217, 5
        %v719 = vsel %vm701, %v717, %v718
        %v720 = vrot.slane %v718, 4
        %v721 = vrot.slane %v218, 5
        %v722 = vsel %vm701, %v720, %v721
        %v723 = vrot.slane %v219, 5
        %v724 = vrot.slane %v723, 4
        %v725 = vrot.slane %v220, 5
        %v726 = vsel %vm701, %v724, %v725
        %v727 = vrot.slane %v725, 4
        %v728 = vrot.slane %v221, 5
        %v729 = vsel %vm701, %v727, %v728
        %v730 = vrot.slane %v222, 5
        %v731 = vrot.slane %v730, 4
        %v732 = vrot.slane %v223, 5
        %v733 = vsel %vm701, %v731, %v732
        %v734 = vrot.slane %v732, 4
        %v735 = vrot.slane %v224, 5
        %v736 = vsel %vm701, %v734, %v735
        %v737 = vrot.slane %v225, 5
        %v738 = vrot.slane %v737, 4
        %v739 = vrot.slane %v226, 5
        %v740 = vsel %vm701, %v738, %v739
        %v741 = vrot.slane %v739, 4
        %v742 = vrot.slane %v227, 5
        %v743 = vsel %vm701, %v741, %v742
        %v744 = vrot.slane %v228, 5
        %v745 = vrot.slane %v744, 4
        %v746 = vrot.slane %v229, 5
        %v747 = vsel %vm701, %v745, %v746
        %v748 = vrot.slane %v746, 4
        %v749 = vrot.slane %v230, 5
        %v750 = vsel %vm701, %v748, %v749
        %v751 = vrot.slane %v231, 5
        %v752 = vrot.slane %v751, 4
        %v753 = vrot.slane %v232, 5
        %v754 = vsel %vm701, %v752, %v753
        %v755 = vrot.slane %v753, 4
        %v756 = vrot.slane %v233, 5
        %v757 = vsel %vm701, %v755, %v756
        %v758 = vrot.slane %v234, 5
        %v759 = vrot.slane %v758, 4
        %v760 = vrot.slane %v235, 5
        %v761 = vsel %vm701, %v759, %v760
        %v762 = vrot.slane %v760, 4
        %v763 = vrot.slane %v236, 5
        %v764 = vsel %vm701, %v762, %v763
        %v765 = vrot.slane %v237, 5
        %v766 = vrot.slane %v765, 4
        %v767 = vrot.slane %v238, 5
        %v768 = vsel %vm701, %v766, %v767
        %v769 = vrot.slane %v767, 4
        %v770 = vrot.slane %v239, 5
        %v771 = vsel %vm701, %v769, %v770
        %v772 = vrot.slane %v240, 5
        %v773 = vrot.slane %v772, 4
        %v774 = vrot.slane %v241, 5
        %v775 = vsel %vm701, %v773, %v774
        %v776 = vrot.slane %v774, 4
        %v777 = vrot.slane %v242, 5
        %v778 = vsel %vm701, %v776, %v777
        %v779 = vrot.slane %v243, 5
        %v780 = vrot.slane %v779, 4
        %v781 = vrot.slane %v244, 5
        %v782 = vsel %vm701, %v780, %v781
        %v783 = vrot.slane %v781, 4
        %v784 = vrot.slane %v245, 5
        %v785 = vsel %vm701, %v783, %v784
        %v786 = vrot.slane %v246, 5
        %v787 = vrot.slane %v786, 4
        %v788 = vrot.slane %v247, 5
        %v789 = vsel %vm701, %v787, %v788
        %v790 = vrot.slane %v788, 4
        %v791 = vrot.slane %v248, 5
        %v792 = vsel %vm701, %v790, %v791
        %v793 = vrot.slane %v249, 5
        %v794 = vrot.slane %v793, 4
        %v795 = vrot.slane %v250, 5
        %v796 = vsel %vm701, %v794, %v795
        %v797 = vrot.slane %v795, 4
        %v798 = vrot.slane %v251, 5
        %v799 = vsel %vm701, %v797, %v798
        %v800 = vrot.slane %v252, 5
        %v801 = vrot.slane %v800, 4
        %v802 = vrot.slane %v253, 5
        %v803 = vsel %vm701, %v801, %v802
        %v804 = vrot.slane %v802, 4
        %v805 = vrot.slane %v254, 5
        %v806 = vsel %vm701, %v804, %v805
        %v807 = vrot.slane %v255, 5
        %v808 = vrot.slane %v807, 4
        %v809 = vrot.slane %v256, 5
        %v810 = vsel %vm701, %v808, %v809
        %v811 = vrot.slane %v809, 4
        %v812 = vrot.slane %v257, 5
        %v813 = vsel %vm701, %v811, %v812
        %v815 = vshrl.u32 %v258, 16
        %v817 = vrot.slane %v815, 4
        %v818 = vshll.u32 %v258, 16
        %v820 = vrot.slane %v818, 5
        %v821 = vor.u32 %v817, %v820
        %v822 = vrot.slane %v821, 4
        %v824 = vshll.u32 %v259, 16
        %v826 = vrot.slane %v824, 5
        %v827 = vsel %vm266, %v822, %v826
        %v828 = vshrl.u32 %v259, 16
        %v830 = vrot.slane %v828, 4
        %v831 = vor.u32 %v830, %v826
        %v832 = vrot.slane %v831, 4
        %v834 = vshll.u32 %v260, 16
        %v836 = vrot.slane %v834, 5
        %v837 = vsel %vm266, %v832, %v836
        %v841 = vrot.slane %v258, 5
        %v842 = vrot.slane %v841, 4
        %v843 = vrot.slane %v259, 5
        %v844 = vsel %vm701, %v842, %v843
        %v845 = vrot.slane %v843, 4
        %v846 = vrot.slane %v260, 5
        %v847 = vsel %vm701, %v845, %v846
        %v849 = vshrl.u32 %v261, 16
        %v851 = vrot.slane %v849, 4
        %v852 = vshll.u32 %v261, 16
        %v854 = vrot.slane %v852, 5
        %v855 = vor.u32 %v851, %v854
        %v856 = vrot.slane %v855, 4
        %v858 = vshll.u32 %v262, 16
        %v860 = vrot.slane %v858, 5
        %v861 = vsel %vm266, %v856, %v860
        %v862 = vshrl.u32 %v262, 16
        %v864 = vrot.slane %v862, 4
        %v865 = vor.u32 %v864, %v860
        %v866 = vrot.slane %v865, 4
        %v868 = vshll.u32 %v263, 16
        %v870 = vrot.slane %v868, 5
        %v871 = vsel %vm266, %v866, %v870
        %v875 = vrot.slane %v261, 5
        %v876 = vrot.slane %v875, 4
        %v877 = vrot.slane %v262, 5
        %v878 = vsel %vm701, %v876, %v877
        %v879 = vrot.slane %v877, 4
        %v880 = vrot.slane %v263, 5
        %v881 = vsel %vm701, %v879, %v880
        %v882 = vunpack.c.l.b16 %v210
        %v883 = vunpack.c.l.b16 %v211
        %v884 = vunpack.c.l.b16 %v213
        %v885 = vunpack.c.l.b16 %v214
        %v886 = vunpack.c.l.b16 %v216
        %v887 = vunpack.c.l.b16 %v217
        %v888 = vunpack.c.l.b16 %v219
        %v889 = vunpack.c.l.b16 %v220
        %v890 = vunpack.c.l.b16 %v222
        %v891 = vunpack.c.l.b16 %v223
        %v892 = vunpack.c.l.b16 %v225
        %v893 = vunpack.c.l.b16 %v226
        %v894 = vunpack.c.l.b16 %v228
        %v895 = vunpack.c.l.b16 %v229
        %v896 = vunpack.c.l.b16 %v231
        %v897 = vunpack.c.l.b16 %v232
        %v898 = vunpack.c.l.b16 %v234
        %v899 = vunpack.c.l.b16 %v235
        %v900 = vunpack.c.l.b16 %v237
        %v901 = vunpack.c.l.b16 %v238
        %v902 = vunpack.c.l.b16 %v240
        %v903 = vunpack.c.l.b16 %v241
        %v904 = vunpack.c.l.b16 %v243
        %v905 = vunpack.c.l.b16 %v244
        %v906 = vunpack.c.l.b16 %v246
        %v907 = vunpack.c.l.b16 %v247
        %v908 = vunpack.c.l.b16 %v249
        %v909 = vunpack.c.l.b16 %v250
        %v910 = vunpack.c.l.b16 %v252
        %v911 = vunpack.c.l.b16 %v253
        %v912 = vunpack.c.l.b16 %v255
        %v913 = vunpack.c.l.b16 %v256
        %v914 = vpack.c.b16 %v883, %v882
        %v915 = vpack.c.b16 %v885, %v884
        %v916 = vpack.c.b16 %v887, %v886
        %v917 = vpack.c.b16 %v889, %v888
        %v918 = vpack.c.b16 %v891, %v890
        %v919 = vpack.c.b16 %v893, %v892
        %v920 = vpack.c.b16 %v895, %v894
        %v921 = vpack.c.b16 %v897, %v896
        %v922 = vpack.c.b16 %v899, %v898
        %v923 = vpack.c.b16 %v901, %v900
        %v924 = vpack.c.b16 %v903, %v902
        %v925 = vpack.c.b16 %v905, %v904
        %v926 = vpack.c.b16 %v907, %v906
        %v927 = vpack.c.b16 %v909, %v908
        %v928 = vpack.c.b16 %v911, %v910
        %v929 = vpack.c.b16 %v913, %v912
        %v930 = vunpack.c.l.b16 %v280
        %v931 = vunpack.c.l.b16 %v290
        %v932 = vunpack.c.l.b16 %v304
        %v933 = vunpack.c.l.b16 %v314
        %v934 = vunpack.c.l.b16 %v328
        %v935 = vunpack.c.l.b16 %v338
        %v936 = vunpack.c.l.b16 %v352
        %v937 = vunpack.c.l.b16 %v362
        %v938 = vunpack.c.l.b16 %v376
        %v939 = vunpack.c.l.b16 %v386
        %v940 = vunpack.c.l.b16 %v400
        %v941 = vunpack.c.l.b16 %v410
        %v942 = vunpack.c.l.b16 %v424
        %v943 = vunpack.c.l.b16 %v434
        %v944 = vunpack.c.l.b16 %v448
        %v945 = vunpack.c.l.b16 %v458
        %v946 = vunpack.c.l.b16 %v472
        %v947 = vunpack.c.l.b16 %v482
        %v948 = vunpack.c.l.b16 %v496
        %v949 = vunpack.c.l.b16 %v506
        %v950 = vunpack.c.l.b16 %v520
        %v951 = vunpack.c.l.b16 %v530
        %v952 = vunpack.c.l.b16 %v544
        %v953 = vunpack.c.l.b16 %v554
        %v954 = vunpack.c.l.b16 %v568
        %v955 = vunpack.c.l.b16 %v578
        %v956 = vunpack.c.l.b16 %v592
        %v957 = vunpack.c.l.b16 %v602
        %v958 = vunpack.c.l.b16 %v616
        %v959 = vunpack.c.l.b16 %v626
        %v960 = vunpack.c.l.b16 %v640
        %v961 = vunpack.c.l.b16 %v650
        %v962 = vpack.c.b16 %v931, %v930
        %v963 = vpack.c.b16 %v933, %v932
        %v964 = vpack.c.b16 %v935, %v934
        %v965 = vpack.c.b16 %v937, %v936
        %v966 = vpack.c.b16 %v939, %v938
        %v967 = vpack.c.b16 %v941, %v940
        %v968 = vpack.c.b16 %v943, %v942
        %v969 = vpack.c.b16 %v945, %v944
        %v970 = vpack.c.b16 %v947, %v946
        %v971 = vpack.c.b16 %v949, %v948
        %v972 = vpack.c.b16 %v951, %v950
        %v973 = vpack.c.b16 %v953, %v952
        %v974 = vpack.c.b16 %v955, %v954
        %v975 = vpack.c.b16 %v957, %v956
        %v976 = vpack.c.b16 %v959, %v958
        %v977 = vpack.c.b16 %v961, %v960
        %978 = vrot.lane.b32.xlu0 %v962, 4
        %v979 = vpop.permute.xlu0 %978
        %980 = vrot.lane.b32.xlu0 %v963, 4
        %v981 = vpop.permute.xlu0 %980
        %982 = vrot.lane.b32.xlu0 %v964, 4
        %v983 = vpop.permute.xlu0 %982
        %984 = vrot.lane.b32.xlu0 %v965, 4
        %v985 = vpop.permute.xlu0 %984
        %986 = vrot.lane.b32.xlu0 %v966, 4
        %v987 = vpop.permute.xlu0 %986
        %988 = vrot.lane.b32.xlu0 %v967, 4
        %v989 = vpop.permute.xlu0 %988
        %990 = vrot.lane.b32.xlu0 %v968, 4
        %v991 = vpop.permute.xlu0 %990
        %992 = vrot.lane.b32.xlu0 %v969, 4
        %v993 = vpop.permute.xlu0 %992
        %994 = vrot.lane.b32.xlu0 %v970, 4
        %v995 = vpop.permute.xlu0 %994
        %996 = vrot.lane.b32.xlu0 %v971, 4
        %v997 = vpop.permute.xlu0 %996
        %998 = vrot.lane.b32.xlu0 %v972, 4
        %v999 = vpop.permute.xlu0 %998
        %1000 = vrot.lane.b32.xlu0 %v973, 4
        %v1001 = vpop.permute.xlu0 %1000
        %1002 = vrot.lane.b32.xlu0 %v974, 4
        %v1003 = vpop.permute.xlu0 %1002
        %1004 = vrot.lane.b32.xlu0 %v975, 4
        %v1005 = vpop.permute.xlu0 %1004
        %1006 = vrot.lane.b32.xlu0 %v976, 4
        %v1007 = vpop.permute.xlu0 %1006
        %1008 = vrot.lane.b32.xlu0 %v977, 4
        %v1009 = vpop.permute.xlu0 %1008
        %v1010 = vunpack.c.l.b16 %v705
        %v1011 = vunpack.c.l.b16 %v708
        %v1012 = vunpack.c.l.b16 %v712
        %v1013 = vunpack.c.l.b16 %v715
        %v1014 = vunpack.c.l.b16 %v719
        %v1015 = vunpack.c.l.b16 %v722
        %v1016 = vunpack.c.l.b16 %v726
        %v1017 = vunpack.c.l.b16 %v729
        %v1018 = vunpack.c.l.b16 %v733
        %v1019 = vunpack.c.l.b16 %v736
        %v1020 = vunpack.c.l.b16 %v740
        %v1021 = vunpack.c.l.b16 %v743
        %v1022 = vunpack.c.l.b16 %v747
        %v1023 = vunpack.c.l.b16 %v750
        %v1024 = vunpack.c.l.b16 %v754
        %v1025 = vunpack.c.l.b16 %v757
        %v1026 = vunpack.c.l.b16 %v761
        %v1027 = vunpack.c.l.b16 %v764
        %v1028 = vunpack.c.l.b16 %v768
        %v1029 = vunpack.c.l.b16 %v771
        %v1030 = vunpack.c.l.b16 %v775
        %v1031 = vunpack.c.l.b16 %v778
        %v1032 = vunpack.c.l.b16 %v782
        %v1033 = vunpack.c.l.b16 %v785
        %v1034 = vunpack.c.l.b16 %v789
        %v1035 = vunpack.c.l.b16 %v792
        %v1036 = vunpack.c.l.b16 %v796
        %v1037 = vunpack.c.l.b16 %v799
        %v1038 = vunpack.c.l.b16 %v803
        %v1039 = vunpack.c.l.b16 %v806
        %v1040 = vunpack.c.l.b16 %v810
        %v1041 = vunpack.c.l.b16 %v813
        %v1042 = vpack.c.b16 %v1011, %v1010
        %v1043 = vpack.c.b16 %v1013, %v1012
        %v1044 = vpack.c.b16 %v1015, %v1014
        %v1045 = vpack.c.b16 %v1017, %v1016
        %v1046 = vpack.c.b16 %v1019, %v1018
        %v1047 = vpack.c.b16 %v1021, %v1020
        %v1048 = vpack.c.b16 %v1023, %v1022
        %v1049 = vpack.c.b16 %v1025, %v1024
        %v1050 = vpack.c.b16 %v1027, %v1026
        %v1051 = vpack.c.b16 %v1029, %v1028
        %v1052 = vpack.c.b16 %v1031, %v1030
        %v1053 = vpack.c.b16 %v1033, %v1032
        %v1054 = vpack.c.b16 %v1035, %v1034
        %v1055 = vpack.c.b16 %v1037, %v1036
        %v1056 = vpack.c.b16 %v1039, %v1038
        %v1057 = vpack.c.b16 %v1041, %v1040
        %1058 = vrot.lane.b32.xlu0 %v1042, 8
        %v1059 = vpop.permute.xlu0 %1058
        %1060 = vrot.lane.b32.xlu0 %v1043, 8
        %v1061 = vpop.permute.xlu0 %1060
        %1062 = vrot.lane.b32.xlu0 %v1044, 8
        %v1063 = vpop.permute.xlu0 %1062
        %1064 = vrot.lane.b32.xlu0 %v1045, 8
        %v1065 = vpop.permute.xlu0 %1064
        %1066 = vrot.lane.b32.xlu0 %v1046, 8
        %v1067 = vpop.permute.xlu0 %1066
        %1068 = vrot.lane.b32.xlu0 %v1047, 8
        %v1069 = vpop.permute.xlu0 %1068
        %1070 = vrot.lane.b32.xlu0 %v1048, 8
        %v1071 = vpop.permute.xlu0 %1070
        %1072 = vrot.lane.b32.xlu0 %v1049, 8
        %v1073 = vpop.permute.xlu0 %1072
        %1074 = vrot.lane.b32.xlu0 %v1050, 8
        %v1075 = vpop.permute.xlu0 %1074
        %1076 = vrot.lane.b32.xlu0 %v1051, 8
        %v1077 = vpop.permute.xlu0 %1076
        %1078 = vrot.lane.b32.xlu0 %v1052, 8
        %v1079 = vpop.permute.xlu0 %1078
        %1080 = vrot.lane.b32.xlu0 %v1053, 8
        %v1081 = vpop.permute.xlu0 %1080
        %1082 = vrot.lane.b32.xlu0 %v1054, 8
        %v1083 = vpop.permute.xlu0 %1082
        %1084 = vrot.lane.b32.xlu0 %v1055, 8
        %v1085 = vpop.permute.xlu0 %1084
        %1086 = vrot.lane.b32.xlu0 %v1056, 8
        %v1087 = vpop.permute.xlu0 %1086
        %1088 = vrot.lane.b32.xlu0 %v1057, 8
        %v1089 = vpop.permute.xlu0 %1088
        %v1090 = vunpack.c.l.b16 %v258
        %v1091 = vunpack.c.l.b16 %v259
        %v1092 = vpack.c.b16 %v1091, %v1090
        %1093 = vrot.lane.b32.xlu0 %v915, 12
        %v1094 = vpop.permute.xlu0 %1093
        %1095 = vrot.lane.b32.xlu0 %v916, 12
        %v1096 = vpop.permute.xlu0 %1095
        %1097 = vrot.lane.b32.xlu0 %v917, 12
        %v1098 = vpop.permute.xlu0 %1097
        %1099 = vrot.lane.b32.xlu0 %v918, 12
        %v1100 = vpop.permute.xlu0 %1099
        %1101 = vrot.lane.b32.xlu0 %v919, 12
        %v1102 = vpop.permute.xlu0 %1101
        %1103 = vrot.lane.b32.xlu0 %v920, 12
        %v1104 = vpop.permute.xlu0 %1103
        %1105 = vrot.lane.b32.xlu0 %v921, 12
        %v1106 = vpop.permute.xlu0 %1105
        %1107 = vrot.lane.b32.xlu0 %v922, 12
        %v1108 = vpop.permute.xlu0 %1107
        %1109 = vrot.lane.b32.xlu0 %v923, 12
        %v1110 = vpop.permute.xlu0 %1109
        %1111 = vrot.lane.b32.xlu0 %v924, 12
        %v1112 = vpop.permute.xlu0 %1111
        %1113 = vrot.lane.b32.xlu0 %v925, 12
        %v1114 = vpop.permute.xlu0 %1113
        %1115 = vrot.lane.b32.xlu0 %v926, 12
        %v1116 = vpop.permute.xlu0 %1115
        %1117 = vrot.lane.b32.xlu0 %v927, 12
        %v1118 = vpop.permute.xlu0 %1117
        %1119 = vrot.lane.b32.xlu0 %v928, 12
        %v1120 = vpop.permute.xlu0 %1119
        %1121 = vrot.lane.b32.xlu0 %v929, 12
        %v1122 = vpop.permute.xlu0 %1121
        %1123 = vrot.lane.b32.xlu0 %v1092, 12
        %v1124 = vpop.permute.xlu0 %1123
        %v1125 = vunpack.c.l.b16 %v827
        %v1126 = vunpack.c.l.b16 %v837
        %v1127 = vpack.c.b16 %v1126, %v1125
        %1128 = vrot.lane.b32.xlu0 %v963, 16
        %v1129 = vpop.permute.xlu0 %1128
        %1130 = vrot.lane.b32.xlu0 %v964, 16
        %v1131 = vpop.permute.xlu0 %1130
        %1132 = vrot.lane.b32.xlu0 %v965, 16
        %v1133 = vpop.permute.xlu0 %1132
        %1134 = vrot.lane.b32.xlu0 %v966, 16
        %v1135 = vpop.permute.xlu0 %1134
        %1136 = vrot.lane.b32.xlu0 %v967, 16
        %v1137 = vpop.permute.xlu0 %1136
        %1138 = vrot.lane.b32.xlu0 %v968, 16
        %v1139 = vpop.permute.xlu0 %1138
        %1140 = vrot.lane.b32.xlu0 %v969, 16
        %v1141 = vpop.permute.xlu0 %1140
        %1142 = vrot.lane.b32.xlu0 %v970, 16
        %v1143 = vpop.permute.xlu0 %1142
        %1144 = vrot.lane.b32.xlu0 %v971, 16
        %v1145 = vpop.permute.xlu0 %1144
        %1146 = vrot.lane.b32.xlu0 %v972, 16
        %v1147 = vpop.permute.xlu0 %1146
        %1148 = vrot.lane.b32.xlu0 %v973, 16
        %v1149 = vpop.permute.xlu0 %1148
        %1150 = vrot.lane.b32.xlu0 %v974, 16
        %v1151 = vpop.permute.xlu0 %1150
        %1152 = vrot.lane.b32.xlu0 %v975, 16
        %v1153 = vpop.permute.xlu0 %1152
        %1154 = vrot.lane.b32.xlu0 %v976, 16
        %v1155 = vpop.permute.xlu0 %1154
        %1156 = vrot.lane.b32.xlu0 %v977, 16
        %v1157 = vpop.permute.xlu0 %1156
        %1158 = vrot.lane.b32.xlu0 %v1127, 16
        %v1159 = vpop.permute.xlu0 %1158
        %v1160 = vunpack.c.l.b16 %v844
        %v1161 = vunpack.c.l.b16 %v847
        %v1162 = vpack.c.b16 %v1161, %v1160
        %1163 = vrot.lane.b32.xlu0 %v1043, 20
        %v1164 = vpop.permute.xlu0 %1163
        %1165 = vrot.lane.b32.xlu0 %v1044, 20
        %v1166 = vpop.permute.xlu0 %1165
        %1167 = vrot.lane.b32.xlu0 %v1045, 20
        %v1168 = vpop.permute.xlu0 %1167
        %1169 = vrot.lane.b32.xlu0 %v1046, 20
        %v1170 = vpop.permute.xlu0 %1169
        %1171 = vrot.lane.b32.xlu0 %v1047, 20
        %v1172 = vpop.permute.xlu0 %1171
        %1173 = vrot.lane.b32.xlu0 %v1048, 20
        %v1174 = vpop.permute.xlu0 %1173
        %1175 = vrot.lane.b32.xlu0 %v1049, 20
        %v1176 = vpop.permute.xlu0 %1175
        %1177 = vrot.lane.b32.xlu0 %v1050, 20
        %v1178 = vpop.permute.xlu0 %1177
        %1179 = vrot.lane.b32.xlu0 %v1051, 20
        %v1180 = vpop.permute.xlu0 %1179
        %1181 = vrot.lane.b32.xlu0 %v1052, 20
        %v1182 = vpop.permute.xlu0 %1181
        %1183 = vrot.lane.b32.xlu0 %v1053, 20
        %v1184 = vpop.permute.xlu0 %1183
        %1185 = vrot.lane.b32.xlu0 %v1054, 20
        %v1186 = vpop.permute.xlu0 %1185
        %1187 = vrot.lane.b32.xlu0 %v1055, 20
        %v1188 = vpop.permute.xlu0 %1187
        %1189 = vrot.lane.b32.xlu0 %v1056, 20
        %v1190 = vpop.permute.xlu0 %1189
        %1191 = vrot.lane.b32.xlu0 %v1057, 20
        %v1192 = vpop.permute.xlu0 %1191
        %1193 = vrot.lane.b32.xlu0 %v1162, 20
        %v1194 = vpop.permute.xlu0 %1193
        %v1195 = vunpack.c.l.b16 %v261
        %v1196 = vunpack.c.l.b16 %v262
        %v1197 = vpack.c.b16 %v1196, %v1195
        %1198 = vrot.lane.b32.xlu0 %v916, 24
        %v1199 = vpop.permute.xlu0 %1198
        %1200 = vrot.lane.b32.xlu0 %v917, 24
        %v1201 = vpop.permute.xlu0 %1200
        %1202 = vrot.lane.b32.xlu0 %v918, 24
        %v1203 = vpop.permute.xlu0 %1202
        %1204 = vrot.lane.b32.xlu0 %v919, 24
        %v1205 = vpop.permute.xlu0 %1204
        %1206 = vrot.lane.b32.xlu0 %v920, 24
        %v1207 = vpop.permute.xlu0 %1206
        %1208 = vrot.lane.b32.xlu0 %v921, 24
        %v1209 = vpop.permute.xlu0 %1208
        %1210 = vrot.lane.b32.xlu0 %v922, 24
        %v1211 = vpop.permute.xlu0 %1210
        %1212 = vrot.lane.b32.xlu0 %v923, 24
        %v1213 = vpop.permute.xlu0 %1212
        %1214 = vrot.lane.b32.xlu0 %v924, 24
        %v1215 = vpop.permute.xlu0 %1214
        %1216 = vrot.lane.b32.xlu0 %v925, 24
        %v1217 = vpop.permute.xlu0 %1216
        %1218 = vrot.lane.b32.xlu0 %v926, 24
        %v1219 = vpop.permute.xlu0 %1218
        %1220 = vrot.lane.b32.xlu0 %v927, 24
        %v1221 = vpop.permute.xlu0 %1220
        %1222 = vrot.lane.b32.xlu0 %v928, 24
        %v1223 = vpop.permute.xlu0 %1222
        %1224 = vrot.lane.b32.xlu0 %v929, 24
        %v1225 = vpop.permute.xlu0 %1224
        %1226 = vrot.lane.b32.xlu0 %v1092, 24
        %v1227 = vpop.permute.xlu0 %1226
        %1228 = vrot.lane.b32.xlu0 %v1197, 24
        %v1229 = vpop.permute.xlu0 %1228
        %v1230 = vunpack.c.l.b16 %v861
        %v1231 = vunpack.c.l.b16 %v871
        %v1232 = vpack.c.b16 %v1231, %v1230
        %1233 = vrot.lane.b32.xlu0 %v964, 28
        %v1234 = vpop.permute.xlu0 %1233
        %1235 = vrot.lane.b32.xlu0 %v965, 28
        %v1236 = vpop.permute.xlu0 %1235
        %1237 = vrot.lane.b32.xlu0 %v966, 28
        %v1238 = vpop.permute.xlu0 %1237
        %1239 = vrot.lane.b32.xlu0 %v967, 28
        %v1240 = vpop.permute.xlu0 %1239
        %1241 = vrot.lane.b32.xlu0 %v968, 28
        %v1242 = vpop.permute.xlu0 %1241
        %1243 = vrot.lane.b32.xlu0 %v969, 28
        %v1244 = vpop.permute.xlu0 %1243
        %1245 = vrot.lane.b32.xlu0 %v970, 28
        %v1246 = vpop.permute.xlu0 %1245
        %1247 = vrot.lane.b32.xlu0 %v971, 28
        %v1248 = vpop.permute.xlu0 %1247
        %1249 = vrot.lane.b32.xlu0 %v972, 28
        %v1250 = vpop.permute.xlu0 %1249
        %1251 = vrot.lane.b32.xlu0 %v973, 28
        %v1252 = vpop.permute.xlu0 %1251
        %1253 = vrot.lane.b32.xlu0 %v974, 28
        %v1254 = vpop.permute.xlu0 %1253
        %1255 = vrot.lane.b32.xlu0 %v975, 28
        %v1256 = vpop.permute.xlu0 %1255
        %1257 = vrot.lane.b32.xlu0 %v976, 28
        %v1258 = vpop.permute.xlu0 %1257
        %1259 = vrot.lane.b32.xlu0 %v977, 28
        %v1260 = vpop.permute.xlu0 %1259
        %1261 = vrot.lane.b32.xlu0 %v1127, 28
        %v1262 = vpop.permute.xlu0 %1261
        %1263 = vrot.lane.b32.xlu0 %v1232, 28
        %v1264 = vpop.permute.xlu0 %1263
        %v1265 = vunpack.c.l.b16 %v878
        %v1266 = vunpack.c.l.b16 %v881
        %v1267 = vpack.c.b16 %v1266, %v1265
        %1268 = vrot.lane.b32.xlu0 %v1044, 32
        %v1269 = vpop.permute.xlu0 %1268
        %1270 = vrot.lane.b32.xlu0 %v1045, 32
        %v1271 = vpop.permute.xlu0 %1270
        %1272 = vrot.lane.b32.xlu0 %v1046, 32
        %v1273 = vpop.permute.xlu0 %1272
        %1274 = vrot.lane.b32.xlu0 %v1047, 32
        %v1275 = vpop.permute.xlu0 %1274
        %1276 = vrot.lane.b32.xlu0 %v1048, 32
        %v1277 = vpop.permute.xlu0 %1276
        %1278 = vrot.lane.b32.xlu0 %v1049, 32
        %v1279 = vpop.permute.xlu0 %1278
        %1280 = vrot.lane.b32.xlu0 %v1050, 32
        %v1281 = vpop.permute.xlu0 %1280
        %1282 = vrot.lane.b32.xlu0 %v1051, 32
        %v1283 = vpop.permute.xlu0 %1282
        %1284 = vrot.lane.b32.xlu0 %v1052, 32
        %v1285 = vpop.permute.xlu0 %1284
        %1286 = vrot.lane.b32.xlu0 %v1053, 32
        %v1287 = vpop.permute.xlu0 %1286
        %1288 = vrot.lane.b32.xlu0 %v1054, 32
        %v1289 = vpop.permute.xlu0 %1288
        %1290 = vrot.lane.b32.xlu0 %v1055, 32
        %v1291 = vpop.permute.xlu0 %1290
        %1292 = vrot.lane.b32.xlu0 %v1056, 32
        %v1293 = vpop.permute.xlu0 %1292
        %1294 = vrot.lane.b32.xlu0 %v1057, 32
        %v1295 = vpop.permute.xlu0 %1294
        %1296 = vrot.lane.b32.xlu0 %v1162, 32
        %v1297 = vpop.permute.xlu0 %1296
        %1298 = vrot.lane.b32.xlu0 %v1267, 32
        %v1299 = vpop.permute.xlu0 %1298
        %vm1300 = vcmask 31744
        %v1303 = vsel %vm1300, %v914, %v979
        %v1306 = vsel %vm1300, %v915, %v981
        %v1309 = vsel %vm1300, %v916, %v983
        %v1312 = vsel %vm1300, %v917, %v985
        %v1315 = vsel %vm1300, %v918, %v987
        %v1318 = vsel %vm1300, %v919, %v989
        %v1321 = vsel %vm1300, %v920, %v991
        %v1324 = vsel %vm1300, %v921, %v993
        %v1327 = vsel %vm1300, %v922, %v995
        %v1330 = vsel %vm1300, %v923, %v997
        %v1333 = vsel %vm1300, %v924, %v999
        %v1336 = vsel %vm1300, %v925, %v1001
        %v1339 = vsel %vm1300, %v926, %v1003
        %v1342 = vsel %vm1300, %v927, %v1005
        %v1345 = vsel %vm1300, %v928, %v1007
        %v1348 = vsel %vm1300, %v929, %v1009
        %vm1349 = vcmask 64512
        %v1351 = vsel %vm1349, %v1303, %v1059
        %v1353 = vsel %vm1349, %v1306, %v1061
        %v1355 = vsel %vm1349, %v1309, %v1063
        %v1357 = vsel %vm1349, %v1312, %v1065
        %v1359 = vsel %vm1349, %v1315, %v1067
        %v1361 = vsel %vm1349, %v1318, %v1069
        %v1363 = vsel %vm1349, %v1321, %v1071
        %v1365 = vsel %vm1349, %v1324, %v1073
        %v1367 = vsel %vm1349, %v1327, %v1075
        %v1369 = vsel %vm1349, %v1330, %v1077
        %v1371 = vsel %vm1349, %v1333, %v1079
        %v1373 = vsel %vm1349, %v1336, %v1081
        %v1375 = vsel %vm1349, %v1339, %v1083
        %v1377 = vsel %vm1349, %v1342, %v1085
        %v1379 = vsel %vm1349, %v1345, %v1087
        %v1381 = vsel %vm1349, %v1348, %v1089
        %vm1382 = vcmask 97280
        %v1384 = vsel %vm1382, %v1351, %v1094
        %v1386 = vsel %vm1382, %v1353, %v1096
        %v1388 = vsel %vm1382, %v1355, %v1098
        %v1390 = vsel %vm1382, %v1357, %v1100
        %v1392 = vsel %vm1382, %v1359, %v1102
        %v1394 = vsel %vm1382, %v1361, %v1104
        %v1396 = vsel %vm1382, %v1363, %v1106
        %v1398 = vsel %vm1382, %v1365, %v1108
        %v1400 = vsel %vm1382, %v1367, %v1110
        %v1402 = vsel %vm1382, %v1369, %v1112
        %v1404 = vsel %vm1382, %v1371, %v1114
        %v1406 = vsel %vm1382, %v1373, %v1116
        %v1408 = vsel %vm1382, %v1375, %v1118
        %v1410 = vsel %vm1382, %v1377, %v1120
        %v1412 = vsel %vm1382, %v1379, %v1122
        %v1414 = vsel %vm1382, %v1381, %v1124
        %vm1415 = vcmask 130048
        %v1417 = vsel %vm1415, %v1384, %v1129
        %v1419 = vsel %vm1415, %v1386, %v1131
        %v1421 = vsel %vm1415, %v1388, %v1133
        %v1423 = vsel %vm1415, %v1390, %v1135
        %v1425 = vsel %vm1415, %v1392, %v1137
        %v1427 = vsel %vm1415, %v1394, %v1139
        %v1429 = vsel %vm1415, %v1396, %v1141
        %v1431 = vsel %vm1415, %v1398, %v1143
        %v1433 = vsel %vm1415, %v1400, %v1145
        %v1435 = vsel %vm1415, %v1402, %v1147
        %v1437 = vsel %vm1415, %v1404, %v1149
        %v1439 = vsel %vm1415, %v1406, %v1151
        %v1441 = vsel %vm1415, %v1408, %v1153
        %v1443 = vsel %vm1415, %v1410, %v1155
        %v1445 = vsel %vm1415, %v1412, %v1157
        %v1447 = vsel %vm1415, %v1414, %v1159
        %vm1448 = vcmask 162816
        %v1450 = vsel %vm1448, %v1417, %v1164
        %v1452 = vsel %vm1448, %v1419, %v1166
        %v1454 = vsel %vm1448, %v1421, %v1168
        %v1456 = vsel %vm1448, %v1423, %v1170
        %v1458 = vsel %vm1448, %v1425, %v1172
        %v1460 = vsel %vm1448, %v1427, %v1174
        %v1462 = vsel %vm1448, %v1429, %v1176
        %v1464 = vsel %vm1448, %v1431, %v1178
        %v1466 = vsel %vm1448, %v1433, %v1180
        %v1468 = vsel %vm1448, %v1435, %v1182
        %v1470 = vsel %vm1448, %v1437, %v1184
        %v1472 = vsel %vm1448, %v1439, %v1186
        %v1474 = vsel %vm1448, %v1441, %v1188
        %v1476 = vsel %vm1448, %v1443, %v1190
        %v1478 = vsel %vm1448, %v1445, %v1192
        %v1480 = vsel %vm1448, %v1447, %v1194
        %vm1481 = vcmask 195584
        %v1483 = vsel %vm1481, %v1450, %v1199
        %v1485 = vsel %vm1481, %v1452, %v1201
        %v1487 = vsel %vm1481, %v1454, %v1203
        %v1489 = vsel %vm1481, %v1456, %v1205
        %v1491 = vsel %vm1481, %v1458, %v1207
        %v1493 = vsel %vm1481, %v1460, %v1209
        %v1495 = vsel %vm1481, %v1462, %v1211
        %v1497 = vsel %vm1481, %v1464, %v1213
        %v1499 = vsel %vm1481, %v1466, %v1215
        %v1501 = vsel %vm1481, %v1468, %v1217
        %v1503 = vsel %vm1481, %v1470, %v1219
        %v1505 = vsel %vm1481, %v1472, %v1221
        %v1507 = vsel %vm1481, %v1474, %v1223
        %v1509 = vsel %vm1481, %v1476, %v1225
        %v1511 = vsel %vm1481, %v1478, %v1227
        %v1513 = vsel %vm1481, %v1480, %v1229
        %vm1514 = vcmask 228352
        %v1516 = vsel %vm1514, %v1483, %v1234
        %v1518 = vsel %vm1514, %v1485, %v1236
        %v1520 = vsel %vm1514, %v1487, %v1238
        %v1522 = vsel %vm1514, %v1489, %v1240
        %v1524 = vsel %vm1514, %v1491, %v1242
        %v1526 = vsel %vm1514, %v1493, %v1244
        %v1528 = vsel %vm1514, %v1495, %v1246
        %v1530 = vsel %vm1514, %v1497, %v1248
        %v1532 = vsel %vm1514, %v1499, %v1250
        %v1534 = vsel %vm1514, %v1501, %v1252
        %v1536 = vsel %vm1514, %v1503, %v1254
        %v1538 = vsel %vm1514, %v1505, %v1256
        %v1540 = vsel %vm1514, %v1507, %v1258
        %v1542 = vsel %vm1514, %v1509, %v1260
        %v1544 = vsel %vm1514, %v1511, %v1262
        %v1546 = vsel %vm1514, %v1513, %v1264
        %vm1547 = vcmask 261120
        %v1549 = vsel %vm1547, %v1516, %v1269
        %v1551 = vsel %vm1547, %v1518, %v1271
        %v1553 = vsel %vm1547, %v1520, %v1273
        %v1555 = vsel %vm1547, %v1522, %v1275
        %v1557 = vsel %vm1547, %v1524, %v1277
        %v1559 = vsel %vm1547, %v1526, %v1279
        %v1561 = vsel %vm1547, %v1528, %v1281
        %v1563 = vsel %vm1547, %v1530, %v1283
        %v1565 = vsel %vm1547, %v1532, %v1285
        %v1567 = vsel %vm1547, %v1534, %v1287
        %v1569 = vsel %vm1547, %v1536, %v1289
        %v1571 = vsel %vm1547, %v1538, %v1291
        %v1573 = vsel %vm1547, %v1540, %v1293
        %v1575 = vsel %vm1547, %v1542, %v1295
        %v1577 = vsel %vm1547, %v1544, %v1297
        %v1579 = vsel %vm1547, %v1546, %v1299
        %v1580 = vld [vmem:[%s1] sm:$0xf]
        %v1581 = vld [vmem:[%s1 + $0x4] sm:$0xf]
        %v1582 = vld [vmem:[%s1 + $0x8] sm:$0xf]
        %v1583 = vld [vmem:[%s1 + $0xc] sm:$0xf]
        %v1584 = vld [vmem:[%s1 + $0x10] sm:$0x3]
        %v1585 = vld [vmem:[%s2] sm:$0x1]
        %v1587 = vlaneseq
        %v1588 = vshrl.u32 %v1587, 7
        %v1589 = vsub.s32 0, %v1588
        %v1590 = vrot.slane %v1585, %v1589
        %v1597 = vunpack.c.l.b16 %v1580
        %v1598 = vunpack.c.l.b16 %v1581
        %v1599 = vunpack.c.l.b16 %v1582
        %v1600 = vunpack.c.l.b16 %v1583
        %v1601 = vunpack.c.l.b16 %v1584
        %v1602 = vpack.c.b16 %v1598, %v1597
        %v1603 = vpack.c.b16 %v1600, %v1599
        %v1604 = vpack.c.b16 %v1601, %v1601
        %vm1607 = vcmask 293888
        %v1608 = vsel %vm1607, %v1549, 0
        %v1610 = vsel %vm1607, %v1551, 0
        %v1612 = vsel %vm1607, %v1553, 0
        %v1614 = vsel %vm1607, %v1555, 0
        %v1616 = vsel %vm1607, %v1557, 0
        %v1618 = vsel %vm1607, %v1559, 0
        %v1620 = vsel %vm1607, %v1561, 0
        %v1622 = vsel %vm1607, %v1563, 0
        %v1624 = vsel %vm1607, %v1565, 0
        %v1626 = vsel %vm1607, %v1567, 0
        %v1628 = vsel %vm1607, %v1569, 0
        %v1630 = vsel %vm1607, %v1571, 0
        %v1632 = vsel %vm1607, %v1573, 0
        %v1634 = vsel %vm1607, %v1575, 0
        %v1636 = vsel %vm1607, %v1577, 0
        %v1638 = vsel %vm1607, %v1579, 0
        %vm1640 = vcmask 1041408
        %v1642 = vsel %vm1640, %v1604, 0
        %1644 = vmatprep.subr.bf16.mxu0 0
        %1645 = vmatpush1.bf16.msra.mxu0 %v1602
        %1646 = vmatprep.subr.bf16.mxu0 0
        %1647 = vmatpush1.bf16.msra.mxu0 %v1603
        %1648 = vmatprep.subr.bf16.mxu0 0
        %1649 = vmatpush1.bf16.msra.mxu0 %v1642
        %1650 = vmatprep.subr.bf16.mxu0 0
        %1651 = vmatpush1.bf16.msra.mxu0 0
        %1652 = vmatprep.subr.bf16.mxu0 0
        %1653 = vmatpush1.bf16.msra.mxu0 0
        %1654 = vmatprep.subr.bf16.mxu0 0
        %1655 = vmatpush1.bf16.msra.mxu0 0
        %1656 = vmatprep.subr.bf16.mxu0 0
        %1657 = vmatpush1.bf16.msra.mxu0 0
        %1658 = vmatprep.subr.bf16.mxu0 0
        %1659 = vmatpush1.bf16.msra.mxu0 0
        %1660 = vmatprep.subr.bf16.mxu0 0
        %1661 = vmatpush1.bf16.msra.mxu0 0
        %1662 = vmatprep.subr.bf16.mxu0 0
        %1663 = vmatpush1.bf16.msra.mxu0 0
        %1664 = vmatprep.subr.bf16.mxu0 0
        %1665 = vmatpush1.bf16.msra.mxu0 0
        %1666 = vmatprep.subr.bf16.mxu0 0
        %1667 = vmatpush1.bf16.msra.mxu0 0
        %1668 = vmatprep.subr.bf16.mxu0 0
        %1669 = vmatpush1.bf16.msra.mxu0 0
        %1670 = vmatprep.subr.bf16.mxu0 0
        %1671 = vmatpush1.bf16.msra.mxu0 0
        %1672 = vmatprep.subr.bf16.mxu0 0
        %1673 = vmatpush1.bf16.msra.mxu0 0
        %1674 = vmatprep.subr.bf16.mxu0 0
        %1675 = vmatpush1.bf16.msra.mxu0 0
        %1676 = vmatprep.mubr.bf16.mxu0 0
        %1677 = vmatmul.mubr.bf16.gmra.mrb[0].mxu0 %v1608
        %v1678 = vpop.f32.mrb[0].mxu0
        %v1679 = vadd.f32 %v1590, %v1678
        %v1680 = vpop.f32.mrb[0].mxu0
        %v1681 = vpop.f32.mrb[0].mxu0
        %v1682 = vadd.f32 %v1590, %v1681
        %v1683 = vpop.f32.mrb[0].mxu0
        %1684 = vmatprep.mubr.bf16.mxu0 0
        %1685 = vmatmul.mubr.bf16.gmra.mrb[0].mxu0 %v1610
        %v1686 = vpop.f32.mrb[0].mxu0
        %v1687 = vadd.f32 %v1590, %v1686
        %v1688 = vpop.f32.mrb[0].mxu0
        %v1689 = vpop.f32.mrb[0].mxu0
        %v1690 = vadd.f32 %v1590, %v1689
        %v1691 = vpop.f32.mrb[0].mxu0
        %1692 = vmatprep.mubr.bf16.mxu0 0
        %1693 = vmatmul.mubr.bf16.gmra.mrb[0].mxu0 %v1612
        %v1694 = vpop.f32.mrb[0].mxu0
        %v1695 = vadd.f32 %v1590, %v1694
        %v1696 = vpop.f32.mrb[0].mxu0
        %v1697 = vpop.f32.mrb[0].mxu0
        %v1698 = vadd.f32 %v1590, %v1697
        %v1699 = vpop.f32.mrb[0].mxu0
        %1700 = vmatprep.mubr.bf16.mxu0 0
        %1701 = vmatmul.mubr.bf16.gmra.mrb[0].mxu0 %v1614
        %v1702 = vpop.f32.mrb[0].mxu0
        %v1703 = vadd.f32 %v1590, %v1702
        %v1704 = vpop.f32.mrb[0].mxu0
        %v1705 = vpop.f32.mrb[0].mxu0
        %v1706 = vadd.f32 %v1590, %v1705
        %v1707 = vpop.f32.mrb[0].mxu0
        %1708 = vmatprep.mubr.bf16.mxu0 0
        %1709 = vmatmul.mubr.bf16.gmra.mrb[0].mxu0 %v1616
        %v1710 = vpop.f32.mrb[0].mxu0
        %v1711 = vadd.f32 %v1590, %v1710
        %v1712 = vpop.f32.mrb[0].mxu0
        %v1713 = vpop.f32.mrb[0].mxu0
        %v1714 = vadd.f32 %v1590, %v1713
        %v1715 = vpop.f32.mrb[0].mxu0
        %1716 = vmatprep.mubr.bf16.mxu0 0
        %1717 = vmatmul.mubr.bf16.gmra.mrb[0].mxu0 %v1618
        %v1718 = vpop.f32.mrb[0].mxu0
        %v1719 = vadd.f32 %v1590, %v1718
        %v1720 = vpop.f32.mrb[0].mxu0
        %v1721 = vpop.f32.mrb[0].mxu0
        %v1722 = vadd.f32 %v1590, %v1721
        %v1723 = vpop.f32.mrb[0].mxu0
        %1724 = vmatprep.mubr.bf16.mxu0 0
        %1725 = vmatmul.mubr.bf16.gmra.mrb[0].mxu0 %v1620
        %v1726 = vpop.f32.mrb[0].mxu0
        %v1727 = vadd.f32 %v1590, %v1726
        %v1728 = vpop.f32.mrb[0].mxu0
        %v1729 = vpop.f32.mrb[0].mxu0
        %v1730 = vadd.f32 %v1590, %v1729
        %v1731 = vpop.f32.mrb[0].mxu0
        %1732 = vmatprep.mubr.bf16.mxu0 0
        %1733 = vmatmul.mubr.bf16.gmra.mrb[0].mxu0 %v1622
        %v1734 = vpop.f32.mrb[0].mxu0
        %v1735 = vadd.f32 %v1590, %v1734
        %v1736 = vpop.f32.mrb[0].mxu0
        %v1737 = vpop.f32.mrb[0].mxu0
        %v1738 = vadd.f32 %v1590, %v1737
        %v1739 = vpop.f32.mrb[0].mxu0
        %1740 = vmatprep.mubr.bf16.mxu0 0
        %1741 = vmatmul.mubr.bf16.gmra.mrb[0].mxu0 %v1624
        %v1742 = vpop.f32.mrb[0].mxu0
        %v1743 = vadd.f32 %v1590, %v1742
        %v1744 = vpop.f32.mrb[0].mxu0
        %v1745 = vpop.f32.mrb[0].mxu0
        %v1746 = vadd.f32 %v1590, %v1745
        %v1747 = vpop.f32.mrb[0].mxu0
        %1748 = vmatprep.mubr.bf16.mxu0 0
        %1749 = vmatmul.mubr.bf16.gmra.mrb[0].mxu0 %v1626
        %v1750 = vpop.f32.mrb[0].mxu0
        %v1751 = vadd.f32 %v1590, %v1750
        %v1752 = vpop.f32.mrb[0].mxu0
        %v1753 = vpop.f32.mrb[0].mxu0
        %v1754 = vadd.f32 %v1590, %v1753
        %v1755 = vpop.f32.mrb[0].mxu0
        %1756 = vmatprep.mubr.bf16.mxu0 0
        %1757 = vmatmul.mubr.bf16.gmra.mrb[0].mxu0 %v1628
        %v1758 = vpop.f32.mrb[0].mxu0
        %v1759 = vadd.f32 %v1590, %v1758
        %v1760 = vpop.f32.mrb[0].mxu0
        %v1761 = vpop.f32.mrb[0].mxu0
        %v1762 = vadd.f32 %v1590, %v1761
        %v1763 = vpop.f32.mrb[0].mxu0
        %1764 = vmatprep.mubr.bf16.mxu0 0
        %1765 = vmatmul.mubr.bf16.gmra.mrb[0].mxu0 %v1630
        %v1766 = vpop.f32.mrb[0].mxu0
        %v1767 = vadd.f32 %v1590, %v1766
        %v1768 = vpop.f32.mrb[0].mxu0
        %v1769 = vpop.f32.mrb[0].mxu0
        %v1770 = vadd.f32 %v1590, %v1769
        %v1771 = vpop.f32.mrb[0].mxu0
        %1772 = vmatprep.mubr.bf16.mxu0 0
        %1773 = vmatmul.mubr.bf16.gmra.mrb[0].mxu0 %v1632
        %v1774 = vpop.f32.mrb[0].mxu0
        %v1775 = vadd.f32 %v1590, %v1774
        %v1776 = vpop.f32.mrb[0].mxu0
        %v1777 = vpop.f32.mrb[0].mxu0
        %v1778 = vadd.f32 %v1590, %v1777
        %v1779 = vpop.f32.mrb[0].mxu0
        %1780 = vmatprep.mubr.bf16.mxu0 0
        %1781 = vmatmul.mubr.bf16.gmra.mrb[0].mxu0 %v1634
        %v1782 = vpop.f32.mrb[0].mxu0
        %v1783 = vadd.f32 %v1590, %v1782
        %v1784 = vpop.f32.mrb[0].mxu0
        %v1785 = vpop.f32.mrb[0].mxu0
        %v1786 = vadd.f32 %v1590, %v1785
        %v1787 = vpop.f32.mrb[0].mxu0
        %1788 = vmatprep.mubr.bf16.mxu0 0
        %1789 = vmatmul.mubr.bf16.gmra.mrb[0].mxu0 %v1636
        %v1790 = vpop.f32.mrb[0].mxu0
        %v1791 = vadd.f32 %v1590, %v1790
        %v1792 = vpop.f32.mrb[0].mxu0
        %v1793 = vpop.f32.mrb[0].mxu0
        %v1794 = vadd.f32 %v1590, %v1793
        %v1795 = vpop.f32.mrb[0].mxu0
        %1796 = vmatprep.mubr.bf16.mxu0 0
        %1797 = vmatmul.mubr.bf16.gmra.mrb[0].mxu0 %v1638
        %v1798 = vpop.f32.mrb[0].mxu0
        %v1799 = vadd.f32 %v1590, %v1798
        %v1800 = vpop.f32.mrb[0].mxu0
        %v1801 = vpop.f32.mrb[0].mxu0
        %v1802 = vadd.f32 %v1590, %v1801
        %v1803 = vpop.f32.mrb[0].mxu0
        %1804 = vdwg.mxu0
        %v1805 = vadd.f32 %v1679, %v1682
        %v1806 = vadd.f32 %v1805, %v1687
        %v1807 = vadd.f32 %v1806, %v1690
        %v1808 = vadd.f32 %v1807, %v1695
        %v1809 = vadd.f32 %v1808, %v1698
        %v1810 = vadd.f32 %v1809, %v1703
        %v1811 = vadd.f32 %v1810, %v1706
        %v1812 = vadd.f32 %v1811, %v1711
        %v1813 = vadd.f32 %v1812, %v1714
        %v1814 = vadd.f32 %v1813, %v1719
        %v1815 = vadd.f32 %v1814, %v1722
        %v1816 = vadd.f32 %v1815, %v1727
        %v1817 = vadd.f32 %v1816, %v1730
        %v1818 = vadd.f32 %v1817, %v1735
        %v1819 = vadd.f32 %v1818, %v1738
        %v1820 = vadd.f32 %v1819, %v1743
        %v1821 = vadd.f32 %v1820, %v1746
        %v1822 = vadd.f32 %v1821, %v1751
        %v1823 = vadd.f32 %v1822, %v1754
        %v1824 = vadd.f32 %v1823, %v1759
        %v1825 = vadd.f32 %v1824, %v1762
        %v1826 = vadd.f32 %v1825, %v1767
        %v1827 = vadd.f32 %v1826, %v1770
        %v1828 = vadd.f32 %v1827, %v1775
        %v1829 = vadd.f32 %v1828, %v1778
        %v1830 = vadd.f32 %v1829, %v1783
        %v1831 = vadd.f32 %v1830, %v1786
        %v1832 = vadd.f32 %v1831, %v1791
        %v1833 = vadd.f32 %v1832, %v1794
        %v1834 = vadd.f32 %v1833, %v1799
        %v1835 = vadd.f32 %v1834, %v1802
        %v1836 = vrot.slane %v1835, 4
        %v1837 = vadd.f32 %v1835, %v1836
        %v1838 = vrot.slane %v1837, 2
        %v1839 = vadd.f32 %v1837, %v1838
        %v1840 = vrot.slane %v1839, 1
        %v1841 = vadd.f32 %v1839, %v1840
        %v1842 = vrcp.pop 256.0
        %v1843 = vmul.f32 %v1841, %v1842
        %v1844 = vsub.f32 %v1679, %v1843
        %v1845 = vsub.f32 %v1682, %v1843
        %v1846 = vsub.f32 %v1687, %v1843
        %v1847 = vsub.f32 %v1690, %v1843
        %v1848 = vsub.f32 %v1695, %v1843
        %v1849 = vsub.f32 %v1698, %v1843
        %v1850 = vsub.f32 %v1703, %v1843
        %v1851 = vsub.f32 %v1706, %v1843
        %v1852 = vsub.f32 %v1711, %v1843
        %v1853 = vsub.f32 %v1714, %v1843
        %v1854 = vsub.f32 %v1719, %v1843
        %v1855 = vsub.f32 %v1722, %v1843
        %v1856 = vsub.f32 %v1727, %v1843
        %v1857 = vsub.f32 %v1730, %v1843
        %v1858 = vsub.f32 %v1735, %v1843
        %v1859 = vsub.f32 %v1738, %v1843
        %v1860 = vsub.f32 %v1743, %v1843
        %v1861 = vsub.f32 %v1746, %v1843
        %v1862 = vsub.f32 %v1751, %v1843
        %v1863 = vsub.f32 %v1754, %v1843
        %v1864 = vsub.f32 %v1759, %v1843
        %v1865 = vsub.f32 %v1762, %v1843
        %v1866 = vsub.f32 %v1767, %v1843
        %v1867 = vsub.f32 %v1770, %v1843
        %v1868 = vsub.f32 %v1775, %v1843
        %v1869 = vsub.f32 %v1778, %v1843
        %v1870 = vsub.f32 %v1783, %v1843
        %v1871 = vsub.f32 %v1786, %v1843
        %v1872 = vsub.f32 %v1791, %v1843
        %v1873 = vsub.f32 %v1794, %v1843
        %v1874 = vsub.f32 %v1799, %v1843
        %v1875 = vsub.f32 %v1802, %v1843
        %v1876 = vmul.f32 %v1844, %v1844
        %v1877 = vmul.f32 %v1845, %v1845
        %v1878 = vmul.f32 %v1846, %v1846
        %v1879 = vmul.f32 %v1847, %v1847
        %v1880 = vmul.f32 %v1848, %v1848
        %v1881 = vmul.f32 %v1849, %v1849
        %v1882 = vmul.f32 %v1850, %v1850
        %v1883 = vmul.f32 %v1851, %v1851
        %v1884 = vmul.f32 %v1852, %v1852
        %v1885 = vmul.f32 %v1853, %v1853
        %v1886 = vmul.f32 %v1854, %v1854
        %v1887 = vmul.f32 %v1855, %v1855
        %v1888 = vmul.f32 %v1856, %v1856
        %v1889 = vmul.f32 %v1857, %v1857
        %v1890 = vmul.f32 %v1858, %v1858
        %v1891 = vmul.f32 %v1859, %v1859
        %v1892 = vmul.f32 %v1860, %v1860
        %v1893 = vmul.f32 %v1861, %v1861
        %v1894 = vmul.f32 %v1862, %v1862
        %v1895 = vmul.f32 %v1863, %v1863
        %v1896 = vmul.f32 %v1864, %v1864
        %v1897 = vmul.f32 %v1865, %v1865
        %v1898 = vmul.f32 %v1866, %v1866
        %v1899 = vmul.f32 %v1867, %v1867
        %v1900 = vmul.f32 %v1868, %v1868
        %v1901 = vmul.f32 %v1869, %v1869
        %v1902 = vmul.f32 %v1870, %v1870
        %v1903 = vmul.f32 %v1871, %v1871
        %v1904 = vmul.f32 %v1872, %v1872
        %v1905 = vmul.f32 %v1873, %v1873
        %v1906 = vmul.f32 %v1874, %v1874
        %v1907 = vmul.f32 %v1875, %v1875
        %v1908 = vadd.f32 %v1876, %v1877
        %v1909 = vadd.f32 %v1908, %v1878
        %v1910 = vadd.f32 %v1909, %v1879
        %v1911 = vadd.f32 %v1910, %v1880
        %v1912 = vadd.f32 %v1911, %v1881
        %v1913 = vadd.f32 %v1912, %v1882
        %v1914 = vadd.f32 %v1913, %v1883
        %v1915 = vadd.f32 %v1914, %v1884
        %v1916 = vadd.f32 %v1915, %v1885
        %v1917 = vadd.f32 %v1916, %v1886
        %v1918 = vadd.f32 %v1917, %v1887
        %v1919 = vadd.f32 %v1918, %v1888
        %v1920 = vadd.f32 %v1919, %v1889
        %v1921 = vadd.f32 %v1920, %v1890
        %v1922 = vadd.f32 %v1921, %v1891
        %v1923 = vadd.f32 %v1922, %v1892
        %v1924 = vadd.f32 %v1923, %v1893
        %v1925 = vadd.f32 %v1924, %v1894
        %v1926 = vadd.f32 %v1925, %v1895
        %v1927 = vadd.f32 %v1926, %v1896
        %v1928 = vadd.f32 %v1927, %v1897
        %v1929 = vadd.f32 %v1928, %v1898
        %v1930 = vadd.f32 %v1929, %v1899
        %v1931 = vadd.f32 %v1930, %v1900
        %v1932 = vadd.f32 %v1931, %v1901
        %v1933 = vadd.f32 %v1932, %v1902
        %v1934 = vadd.f32 %v1933, %v1903
        %v1935 = vadd.f32 %v1934, %v1904
        %v1936 = vadd.f32 %v1935, %v1905
        %v1937 = vadd.f32 %v1936, %v1906
        %v1938 = vadd.f32 %v1937, %v1907
        %v1939 = vrot.slane %v1938, 4
        %v1940 = vadd.f32 %v1938, %v1939
        %v1941 = vrot.slane %v1940, 2
        %v1942 = vadd.f32 %v1940, %v1941
        %v1943 = vrot.slane %v1942, 1
        %v1944 = vadd.f32 %v1942, %v1943
        %1945 = vst [vmem:[%s198] sm:$0x1] %v1843
        %1946 = vst [vmem:[%s198 + $0x1] sm:$0x1] %v1944
        %v1947 = vpack.c.bf16 %v1682, %v1679
        %v1948 = vpack.c.bf16 %v1690, %v1687
        %v1949 = vpack.c.bf16 %v1698, %v1695
        %v1950 = vpack.c.bf16 %v1706, %v1703
        %v1951 = vpack.c.bf16 %v1714, %v1711
        %v1952 = vpack.c.bf16 %v1722, %v1719
        %v1953 = vpack.c.bf16 %v1730, %v1727
        %v1954 = vpack.c.bf16 %v1738, %v1735
        %v1955 = vpack.c.bf16 %v1746, %v1743
        %v1956 = vpack.c.bf16 %v1754, %v1751
        %v1957 = vpack.c.bf16 %v1762, %v1759
        %v1958 = vpack.c.bf16 %v1770, %v1767
        %v1959 = vpack.c.bf16 %v1778, %v1775
        %v1960 = vpack.c.bf16 %v1786, %v1783
        %v1961 = vpack.c.bf16 %v1794, %v1791
        %v1962 = vpack.c.bf16 %v1802, %v1799
        %v1979 = vunpack.c.l.b16 %v1947
        %v1980 = vunpack.c.h.b16 %v1947
        %v1981 = vunpack.c.l.b16 %v1948
        %v1982 = vunpack.c.h.b16 %v1948
        %v1983 = vunpack.c.l.b16 %v1949
        %v1984 = vunpack.c.h.b16 %v1949
        %v1985 = vunpack.c.l.b16 %v1950
        %v1986 = vunpack.c.h.b16 %v1950
        %v1987 = vunpack.c.l.b16 %v1951
        %v1988 = vunpack.c.h.b16 %v1951
        %v1989 = vunpack.c.l.b16 %v1952
        %v1990 = vunpack.c.h.b16 %v1952
        %v1991 = vunpack.c.l.b16 %v1953
        %v1992 = vunpack.c.h.b16 %v1953
        %v1993 = vunpack.c.l.b16 %v1954
        %v1994 = vunpack.c.h.b16 %v1954
        %v1995 = vunpack.c.l.b16 %v1955
        %v1996 = vunpack.c.h.b16 %v1955
        %v1997 = vunpack.c.l.b16 %v1956
        %v1998 = vunpack.c.h.b16 %v1956
        %v1999 = vunpack.c.l.b16 %v1957
        %v2000 = vunpack.c.h.b16 %v1957
        %v2001 = vunpack.c.l.b16 %v1958
        %v2002 = vunpack.c.h.b16 %v1958
        %v2003 = vunpack.c.l.b16 %v1959
        %v2004 = vunpack.c.h.b16 %v1959
        %v2005 = vunpack.c.l.b16 %v1960
        %v2006 = vunpack.c.h.b16 %v1960
        %v2007 = vunpack.c.l.b16 %v1961
        %v2008 = vunpack.c.h.b16 %v1961
        %v2009 = vunpack.c.l.b16 %v1962
        %v2010 = vunpack.c.h.b16 %v1962
        %v2011 = vpack.c.b16 %v1979, %v1979
        %v2012 = vpack.c.b16 %v1980, %v1980
        %v2013 = vpack.c.b16 %v1981, %v1981
        %v2014 = vpack.c.b16 %v1982, %v1982
        %v2015 = vpack.c.b16 %v1983, %v1983
        %v2016 = vpack.c.b16 %v1984, %v1984
        %v2017 = vpack.c.b16 %v1985, %v1985
        %v2018 = vpack.c.b16 %v1986, %v1986
        %v2019 = vpack.c.b16 %v1987, %v1987
        %v2020 = vpack.c.b16 %v1988, %v1988
        %v2021 = vpack.c.b16 %v1989, %v1989
        %v2022 = vpack.c.b16 %v1990, %v1990
        %v2023 = vpack.c.b16 %v1991, %v1991
        %v2024 = vpack.c.b16 %v1992, %v1992
        %v2025 = vpack.c.b16 %v1993, %v1993
        %v2026 = vpack.c.b16 %v1994, %v1994
        %v2027 = vpack.c.b16 %v1995, %v1995
        %v2028 = vpack.c.b16 %v1996, %v1996
        %v2029 = vpack.c.b16 %v1997, %v1997
        %v2030 = vpack.c.b16 %v1998, %v1998
        %v2031 = vpack.c.b16 %v1999, %v1999
        %v2032 = vpack.c.b16 %v2000, %v2000
        %v2033 = vpack.c.b16 %v2001, %v2001
        %v2034 = vpack.c.b16 %v2002, %v2002
        %v2035 = vpack.c.b16 %v2003, %v2003
        %v2036 = vpack.c.b16 %v2004, %v2004
        %v2037 = vpack.c.b16 %v2005, %v2005
        %v2038 = vpack.c.b16 %v2006, %v2006
        %v2039 = vpack.c.b16 %v2007, %v2007
        %v2040 = vpack.c.b16 %v2008, %v2008
        %v2041 = vpack.c.b16 %v2009, %v2009
        %v2042 = vpack.c.b16 %v2010, %v2010
        %vm2043 = vsmask.f32 256
        %vm2044 = vsmask.f32 4368
        %vm2045 = vmor %vm2043, %vm2044
        %v2047 = vshrl.u32 %v2011, 16
        %v2049 = vrot.slane %v2047, 7
        %v2050 = vshll.u32 %v2011, 16
        %v2052 = vor.u32 %v2049, %v2050
        %v2053 = vrot.slane %v2049, 4
        %v2055 = vshrl.u32 %v2012, 16
        %v2057 = vrot.slane %v2055, 7
        %v2058 = vshll.u32 %v2012, 16
        %v2060 = vor.u32 %v2057, %v2058
        %v2061 = vsel %vm2045, %v2053, %v2060
        %v2062 = vrot.slane %v2057, 4
        %v2064 = vshrl.u32 %v2013, 16
        %v2066 = vrot.slane %v2064, 7
        %v2067 = vshll.u32 %v2013, 16
        %v2069 = vor.u32 %v2066, %v2067
        %v2070 = vrot.slane %v2066, 4
        %v2072 = vshrl.u32 %v2014, 16
        %v2074 = vrot.slane %v2072, 7
        %v2075 = vshll.u32 %v2014, 16
        %v2077 = vor.u32 %v2074, %v2075
        %v2078 = vsel %vm2045, %v2070, %v2077
        %v2079 = vrot.slane %v2074, 4
        %v2081 = vshrl.u32 %v2015, 16
        %v2083 = vrot.slane %v2081, 7
        %v2084 = vshll.u32 %v2015, 16
        %v2086 = vor.u32 %v2083, %v2084
        %v2087 = vrot.slane %v2083, 4
        %v2089 = vshrl.u32 %v2016, 16
        %v2091 = vrot.slane %v2089, 7
        %v2092 = vshll.u32 %v2016, 16
        %v2094 = vor.u32 %v2091, %v2092
        %v2095 = vsel %vm2045, %v2087, %v2094
        %v2096 = vrot.slane %v2091, 4
        %v2098 = vshrl.u32 %v2017, 16
        %v2100 = vrot.slane %v2098, 7
        %v2101 = vshll.u32 %v2017, 16
        %v2103 = vor.u32 %v2100, %v2101
        %v2104 = vrot.slane %v2100, 4
        %v2106 = vshrl.u32 %v2018, 16
        %v2108 = vrot.slane %v2106, 7
        %v2109 = vshll.u32 %v2018, 16
        %v2111 = vor.u32 %v2108, %v2109
        %v2112 = vsel %vm2045, %v2104, %v2111
        %v2113 = vrot.slane %v2108, 4
        %v2115 = vshrl.u32 %v2019, 16
        %v2117 = vrot.slane %v2115, 7
        %v2118 = vshll.u32 %v2019, 16
        %v2120 = vor.u32 %v2117, %v2118
        %v2121 = vrot.slane %v2117, 4
        %v2123 = vshrl.u32 %v2020, 16
        %v2125 = vrot.slane %v2123, 7
        %v2126 = vshll.u32 %v2020, 16
        %v2128 = vor.u32 %v2125, %v2126
        %v2129 = vsel %vm2045, %v2121, %v2128
        %v2130 = vrot.slane %v2125, 4
        %v2132 = vshrl.u32 %v2021, 16
        %v2134 = vrot.slane %v2132, 7
        %v2135 = vshll.u32 %v2021, 16
        %v2137 = vor.u32 %v2134, %v2135
        %v2138 = vrot.slane %v2134, 4
        %v2140 = vshrl.u32 %v2022, 16
        %v2142 = vrot.slane %v2140, 7
        %v2143 = vshll.u32 %v2022, 16
        %v2145 = vor.u32 %v2142, %v2143
        %v2146 = vsel %vm2045, %v2138, %v2145
        %v2147 = vrot.slane %v2142, 4
        %v2149 = vshrl.u32 %v2023, 16
        %v2151 = vrot.slane %v2149, 7
        %v2152 = vshll.u32 %v2023, 16
        %v2154 = vor.u32 %v2151, %v2152
        %v2155 = vrot.slane %v2151, 4
        %v2157 = vshrl.u32 %v2024, 16
        %v2159 = vrot.slane %v2157, 7
        %v2160 = vshll.u32 %v2024, 16
        %v2162 = vor.u32 %v2159, %v2160
        %v2163 = vsel %vm2045, %v2155, %v2162
        %v2164 = vrot.slane %v2159, 4
        %v2166 = vshrl.u32 %v2025, 16
        %v2168 = vrot.slane %v2166, 7
        %v2169 = vshll.u32 %v2025, 16
        %v2171 = vor.u32 %v2168, %v2169
        %v2172 = vrot.slane %v2168, 4
        %v2174 = vshrl.u32 %v2026, 16
        %v2176 = vrot.slane %v2174, 7
        %v2177 = vshll.u32 %v2026, 16
        %v2179 = vor.u32 %v2176, %v2177
        %v2180 = vsel %vm2045, %v2172, %v2179
        %v2181 = vrot.slane %v2176, 4
        %v2183 = vshrl.u32 %v2027, 16
        %v2185 = vrot.slane %v2183, 7
        %v2186 = vshll.u32 %v2027, 16
        %v2188 = vor.u32 %v2185, %v2186
        %v2189 = vrot.slane %v2185, 4
        %v2191 = vshrl.u32 %v2028, 16
        %v2193 = vrot.slane %v2191, 7
        %v2194 = vshll.u32 %v2028, 16
        %v2196 = vor.u32 %v2193, %v2194
        %v2197 = vsel %vm2045, %v2189, %v2196
        %v2198 = vrot.slane %v2193, 4
        %v2200 = vshrl.u32 %v2029, 16
        %v2202 = vrot.slane %v2200, 7
        %v2203 = vshll.u32 %v2029, 16
        %v2205 = vor.u32 %v2202, %v2203
        %v2206 = vrot.slane %v2202, 4
        %v2208 = vshrl.u32 %v2030, 16
        %v2210 = vrot.slane %v2208, 7
        %v2211 = vshll.u32 %v2030, 16
        %v2213 = vor.u32 %v2210, %v2211
        %v2214 = vsel %vm2045, %v2206, %v2213
        %v2215 = vrot.slane %v2210, 4
        %v2217 = vshrl.u32 %v2031, 16
        %v2219 = vrot.slane %v2217, 7
        %v2220 = vshll.u32 %v2031, 16
        %v2222 = vor.u32 %v2219, %v2220
        %v2223 = vrot.slane %v2219, 4
        %v2225 = vshrl.u32 %v2032, 16
        %v2227 = vrot.slane %v2225, 7
        %v2228 = vshll.u32 %v2032, 16
        %v2230 = vor.u32 %v2227, %v2228
        %v2231 = vsel %vm2045, %v2223, %v2230
        %v2232 = vrot.slane %v2227, 4
        %v2234 = vshrl.u32 %v2033, 16
        %v2236 = vrot.slane %v2234, 7
        %v2237 = vshll.u32 %v2033, 16
        %v2239 = vor.u32 %v2236, %v2237
        %v2240 = vrot.slane %v2236, 4
        %v2242 = vshrl.u32 %v2034, 16
        %v2244 = vrot.slane %v2242, 7
        %v2245 = vshll.u32 %v2034, 16
        %v2247 = vor.u32 %v2244, %v2245
        %v2248 = vsel %vm2045, %v2240, %v2247
        %v2249 = vrot.slane %v2244, 4
        %v2251 = vshrl.u32 %v2035, 16
        %v2253 = vrot.slane %v2251, 7
        %v2254 = vshll.u32 %v2035, 16
        %v2256 = vor.u32 %v2253, %v2254
        %v2257 = vrot.slane %v2253, 4
        %v2259 = vshrl.u32 %v2036, 16
        %v2261 = vrot.slane %v2259, 7
        %v2262 = vshll.u32 %v2036, 16
        %v2264 = vor.u32 %v2261, %v2262
        %v2265 = vsel %vm2045, %v2257, %v2264
        %v2266 = vrot.slane %v2261, 4
        %v2268 = vshrl.u32 %v2037, 16
        %v2270 = vrot.slane %v2268, 7
        %v2271 = vshll.u32 %v2037, 16
        %v2273 = vor.u32 %v2270, %v2271
        %v2274 = vrot.slane %v2270, 4
        %v2276 = vshrl.u32 %v2038, 16
        %v2278 = vrot.slane %v2276, 7
        %v2279 = vshll.u32 %v2038, 16
        %v2281 = vor.u32 %v2278, %v2279
        %v2282 = vsel %vm2045, %v2274, %v2281
        %v2283 = vrot.slane %v2278, 4
        %v2285 = vshrl.u32 %v2039, 16
        %v2287 = vrot.slane %v2285, 7
        %v2288 = vshll.u32 %v2039, 16
        %v2290 = vor.u32 %v2287, %v2288
        %v2291 = vrot.slane %v2287, 4
        %v2293 = vshrl.u32 %v2040, 16
        %v2295 = vrot.slane %v2293, 7
        %v2296 = vshll.u32 %v2040, 16
        %v2298 = vor.u32 %v2295, %v2296
        %v2299 = vsel %vm2045, %v2291, %v2298
        %v2300 = vrot.slane %v2295, 4
        %v2302 = vshrl.u32 %v2041, 16
        %v2304 = vrot.slane %v2302, 7
        %v2305 = vshll.u32 %v2041, 16
        %v2307 = vor.u32 %v2304, %v2305
        %v2308 = vrot.slane %v2304, 4
        %v2310 = vshrl.u32 %v2042, 16
        %v2312 = vrot.slane %v2310, 7
        %v2313 = vshll.u32 %v2042, 16
        %v2315 = vor.u32 %v2312, %v2313
        %v2316 = vsel %vm2045, %v2308, %v2315
        %v2317 = vrot.slane %v2312, 4
        %s2366 = scalar_lea.vmem %s208, 12
        %vm2367 = vcmask 1043456
        %vm2368 = vsmask.f32 7938
        %vm2369 = vmand %vm2367, %vm2368
        %v2370 = vld [vmem:[%s2366] sm:$0xf]
        %v2371 = vsel %vm2369, %v2052, %v2370
        %2372 = vst [vmem:[%s2366] sm:$0xf] %v2371
        %2373 = vst [vmem:[%s2366 + $0x4] sm:$0xf] %v2061
        %vm2374 = vcmask 1040384
        %vm2375 = vmand %vm2374, %vm2043
        %v2376 = vld [vmem:[%s2366 + $0x8] sm:$0x1]
        %v2377 = vsel %vm2375, %v2062, %v2376
        %2378 = vst [vmem:[%s2366 + $0x8] sm:$0x1] %v2377
        %v2379 = vld [vmem:[%s2366 + $0xc] sm:$0xf]
        %v2380 = vsel %vm2369, %v2069, %v2379
        %2381 = vst [vmem:[%s2366 + $0xc] sm:$0xf] %v2380
        %2382 = vst [vmem:[%s2366 + $0x10] sm:$0xf] %v2078
        %v2383 = vld [vmem:[%s2366 + $0x14] sm:$0x1]
        %v2384 = vsel %vm2375, %v2079, %v2383
        %2385 = vst [vmem:[%s2366 + $0x14] sm:$0x1] %v2384
        %v2386 = vld [vmem:[%s2366 + $0x18] sm:$0xf]
        %v2387 = vsel %vm2369, %v2086, %v2386
        %2388 = vst [vmem:[%s2366 + $0x18] sm:$0xf] %v2387
        %2389 = vst [vmem:[%s2366 + $0x1c] sm:$0xf] %v2095
        %v2390 = vld [vmem:[%s2366 + $0x20] sm:$0x1]
        %v2391 = vsel %vm2375, %v2096, %v2390
        %2392 = vst [vmem:[%s2366 + $0x20] sm:$0x1] %v2391
        %v2393 = vld [vmem:[%s2366 + $0x24] sm:$0xf]
        %v2394 = vsel %vm2369, %v2103, %v2393
        %2395 = vst [vmem:[%s2366 + $0x24] sm:$0xf] %v2394
        %2396 = vst [vmem:[%s2366 + $0x28] sm:$0xf] %v2112
        %v2397 = vld [vmem:[%s2366 + $0x2c] sm:$0x1]
        %v2398 = vsel %vm2375, %v2113, %v2397
        %2399 = vst [vmem:[%s2366 + $0x2c] sm:$0x1] %v2398
        %v2400 = vld [vmem:[%s2366 + $0x30] sm:$0xf]
        %v2401 = vsel %vm2369, %v2120, %v2400
        %2402 = vst [vmem:[%s2366 + $0x30] sm:$0xf] %v2401
        %2403 = vst [vmem:[%s2366 + $0x34] sm:$0xf] %v2129
        %v2404 = vld [vmem:[%s2366 + $0x38] sm:$0x1]
        %v2405 = vsel %vm2375, %v2130, %v2404
        %2406 = vst [vmem:[%s2366 + $0x38] sm:$0x1] %v2405
        %v2407 = vld [vmem:[%s2366 + $0x3c] sm:$0xf]
        %v2408 = vsel %vm2369, %v2137, %v2407
        %2409 = vst [vmem:[%s2366 + $0x3c] sm:$0xf] %v2408
        %2410 = vst [vmem:[%s2366 + $0x40] sm:$0xf] %v2146
        %v2411 = vld [vmem:[%s2366 + $0x44] sm:$0x1]
        %v2412 = vsel %vm2375, %v2147, %v2411
        %2413 = vst [vmem:[%s2366 + $0x44] sm:$0x1] %v2412
        %v2414 = vld [vmem:[%s2366 + $0x48] sm:$0xf]
        %v2415 = vsel %vm2369, %v2154, %v2414
        %2416 = vst [vmem:[%s2366 + $0x48] sm:$0xf] %v2415
        %2417 = vst [vmem:[%s2366 + $0x4c] sm:$0xf] %v2163
        %v2418 = vld [vmem:[%s2366 + $0x50] sm:$0x1]
        %v2419 = vsel %vm2375, %v2164, %v2418
        %2420 = vst [vmem:[%s2366 + $0x50] sm:$0x1] %v2419
        %v2421 = vld [vmem:[%s2366 + $0x54] sm:$0xf]
        %v2422 = vsel %vm2369, %v2171, %v2421
        %2423 = vst [vmem:[%s2366 + $0x54] sm:$0xf] %v2422
        %2424 = vst [vmem:[%s2366 + $0x58] sm:$0xf] %v2180
        %v2425 = vld [vmem:[%s2366 + $0x5c] sm:$0x1]
        %v2426 = vsel %vm2375, %v2181, %v2425
        %2427 = vst [vmem:[%s2366 + $0x5c] sm:$0x1] %v2426
        %v2428 = vld [vmem:[%s2366 + $0x60] sm:$0xf]
        %v2429 = vsel %vm2369, %v2188, %v2428
        %2430 = vst [vmem:[%s2366 + $0x60] sm:$0xf] %v2429
        %2431 = vst [vmem:[%s2366 + $0x64] sm:$0xf] %v2197
        %v2432 = vld [vmem:[%s2366 + $0x68] sm:$0x1]
        %v2433 = vsel %vm2375, %v2198, %v2432
        %2434 = vst [vmem:[%s2366 + $0x68] sm:$0x1] %v2433
        %v2435 = vld [vmem:[%s2366 + $0x6c] sm:$0xf]
        %v2436 = vsel %vm2369, %v2205, %v2435
        %2437 = vst [vmem:[%s2366 + $0x6c] sm:$0xf] %v2436
        %2438 = vst [vmem:[%s2366 + $0x70] sm:$0xf] %v2214
        %v2439 = vld [vmem:[%s2366 + $0x74] sm:$0x1]
        %v2440 = vsel %vm2375, %v2215, %v2439
        %2441 = vst [vmem:[%s2366 + $0x74] sm:$0x1] %v2440
        %v2442 = vld [vmem:[%s2366 + $0x78] sm:$0xf]
        %v2443 = vsel %vm2369, %v2222, %v2442
        %2444 = vst [vmem:[%s2366 + $0x78] sm:$0xf] %v2443
        %2445 = vst [vmem:[%s2366 + $0x7c] sm:$0xf] %v2231
        %v2446 = vld [vmem:[%s2366 + $0x80] sm:$0x1]
        %v2447 = vsel %vm2375, %v2232, %v2446
        %2448 = vst [vmem:[%s2366 + $0x80] sm:$0x1] %v2447
        %v2449 = vld [vmem:[%s2366 + $0x84] sm:$0xf]
        %v2450 = vsel %vm2369, %v2239, %v2449
        %2451 = vst [vmem:[%s2366 + $0x84] sm:$0xf] %v2450
        %2452 = vst [vmem:[%s2366 + $0x88] sm:$0xf] %v2248
        %v2453 = vld [vmem:[%s2366 + $0x8c] sm:$0x1]
        %v2454 = vsel %vm2375, %v2249, %v2453
        %2455 = vst [vmem:[%s2366 + $0x8c] sm:$0x1] %v2454
        %v2456 = vld [vmem:[%s2366 + $0x90] sm:$0xf]
        %v2457 = vsel %vm2369, %v2256, %v2456
        %2458 = vst [vmem:[%s2366 + $0x90] sm:$0xf] %v2457
        %2459 = vst [vmem:[%s2366 + $0x94] sm:$0xf] %v2265
        %v2460 = vld [vmem:[%s2366 + $0x98] sm:$0x1]
        %v2461 = vsel %vm2375, %v2266, %v2460
        %2462 = vst [vmem:[%s2366 + $0x98] sm:$0x1] %v2461
        %v2463 = vld [vmem:[%s2366 + $0x9c] sm:$0xf]
        %v2464 = vsel %vm2369, %v2273, %v2463
        %2465 = vst [vmem:[%s2366 + $0x9c] sm:$0xf] %v2464
        %2466 = vst [vmem:[%s2366 + $0xa0] sm:$0xf] %v2282
        %v2467 = vld [vmem:[%s2366 + $0xa4] sm:$0x1]
        %v2468 = vsel %vm2375, %v2283, %v2467
        %2469 = vst [vmem:[%s2366 + $0xa4] sm:$0x1] %v2468
        %v2470 = vld [vmem:[%s2366 + $0xa8] sm:$0xf]
        %v2471 = vsel %vm2369, %v2290, %v2470
        %2472 = vst [vmem:[%s2366 + $0xa8] sm:$0xf] %v2471
        %2473 = vst [vmem:[%s2366 + $0xac] sm:$0xf] %v2299
        %v2474 = vld [vmem:[%s2366 + $0xb0] sm:$0x1]
        %v2475 = vsel %vm2375, %v2300, %v2474
        %2476 = vst [vmem:[%s2366 + $0xb0] sm:$0x1] %v2475
        %v2477 = vld [vmem:[%s2366 + $0xb4] sm:$0xf]
        %v2478 = vsel %vm2369, %v2307, %v2477
        %2479 = vst [vmem:[%s2366 + $0xb4] sm:$0xf] %v2478
        %2480 = vst [vmem:[%s2366 + $0xb8] sm:$0xf] %v2316
        %v2481 = vld [vmem:[%s2366 + $0xbc] sm:$0x1]
        %v2482 = vsel %vm2375, %v2317, %v2481
        %2483 = vst [vmem:[%s2366 + $0xbc] sm:$0x1] %v2482
        %p2484 = scmp.lt.s32.totalorder %s19, 1
        %s2485 = scalar_select %p2484, %s19, 1
        %s2486 = smul.addr %s2485, 54
        %s2487 = smul.addr %s2486, 4
        %s2488 = scalar_lea.vmem %s3, %s2487
        %s2489 = sand.u32 %s121, 1
        %s2490 = scalar_lea.sflag [#allocation3], %s2489
        %s2491 = sand.u32 %s121, 1
        %s2492 = smul.addr %s2491, 2
        %s2493 = scalar_lea.vmem [#allocation2], %s2492
        // Predicated region
        $region33: #{tpu_custom_call.1} parent=31 // pred_check
          %p2494 = pneg %p105
        $region34: #{tpu_custom_call.1} parent=31 // pred_check_branch
          %2496 = sbr.rel (%p2494) target = $region36
        $region35: #{tpu_custom_call.1} parent=31 // pred_region
          _
        $region36: #{tpu_custom_call.1} parent=31 // pred_fallthru
          _
        // Predicated region
        $region37: #{tpu_custom_call.1} parent=31 // pred_check
          %p2497 = pneg %p131
        $region38: #{tpu_custom_call.1} parent=31 // pred_check_branch
          %2499 = sbr.rel (%p2497) target = $region40
        $region39: #{tpu_custom_call.1} parent=31 // pred_region
          %s2501 = ssub.s32 32, 32
          %2502 = vsyncadd %s2490, %s2501
          %s2503 = smul.addr %s19, 32
          %s2504 = scalar_lea.hbm %s4, %s2503
          %s2506 = sshll.u32 %s2493, 4
          %s2507 = int_to_ptr.vmem [resolvable:$true] %s2506
          %2509 = dma.vmem_to_hbm [thread:$0]  %s2507, 32, %s2504, %s2490
        $region40: #{tpu_custom_call.1} parent=31 // pred_fallthru
          _
      $region32: #{tpu_custom_call.1} parent=5 // pred_fallthru
        _
      %p2510 = scmp.le.s32.totalorder 2, %s14
      // Predicated region
      $region41: #{tpu_custom_call.1} parent=5 // pred_check
        %p2511 = pneg %p2510
      $region42: #{tpu_custom_call.1} parent=5 // pred_check_branch
        %2513 = sbr.rel (%p2511) target = $region44
      $region43: #{tpu_custom_call.1} parent=5 // pred_region
        %s2514 = ssub.s32 %s14, 2
        // Predicated region
        $region45: #{tpu_custom_call.1} parent=43 // pred_check
          %p2515 = pneg %p111
        $region46: #{tpu_custom_call.1} parent=43 // pred_check_branch
          %2517 = sbr.rel (%p2515) target = $region48
        $region47: #{tpu_custom_call.1} parent=43 // pred_region
          %p2518 = scmp.lt.s32.totalorder %s20, 1
          %s2519 = scalar_select %p2518, %s20, 1
          %s2520 = smul.addr %s2519, 54
          %s2521 = smul.addr %s2520, 4
          %s2522 = scalar_lea.vmem %s3, %s2521
        $region48: #{tpu_custom_call.1} parent=43 // pred_fallthru
          _
        // Predicated region
        $region49: #{tpu_custom_call.1} parent=43 // pred_check
          %p2523 = pneg %p137
        $region50: #{tpu_custom_call.1} parent=43 // pred_check_branch
          %2525 = sbr.rel (%p2523) target = $region52
        $region51: #{tpu_custom_call.1} parent=43 // pred_region
          %s2526 = sand.u32 %s122, 1
          %s2527 = scalar_lea.sflag [#allocation3], %s2526
          %s2528 = sand.u32 %s122, 1
          %s2529 = smul.addr %s2528, 2
          %s2530 = scalar_lea.vmem [#allocation2], %s2529
          %2531 = dma.done %s2527, 32
        $region52: #{tpu_custom_call.1} parent=43 // pred_fallthru
          _
      $region44: #{tpu_custom_call.1} parent=5 // pred_fallthru
        _
    $region6: #{tpu_custom_call.1} parent=1 // loop_footer
      %s18 = sadd.s32 1, %s14
    $region7: #{tpu_custom_call.1} parent=1 // loop_footer_branch
      %13 = sbr.rel target = $region3
    $region8: #{tpu_custom_call.1} parent=1 // loop_exit
      _
    %2532 = vsyncpa [#allocation3], 1
    %s2533 = scalar_lea.sflag [#allocation3], 1
    %2534 = vsyncpa %s2533, 1

</llo_original>
